<compile_context>
chip_gen: v7x
topology: tpu7x:2x2x1
jax: 0.10.0
libtpu: 0.0.40
codegen_flags: <defaults>
</compile_context>

<pallas_src>
import numpy as np
import jax
import jax.numpy as jnp
from jax.experimental import pallas as pl
from jax.experimental.pallas import tpu as pltpu


# ----------------------------- fused Pallas kernel -----------------------------------
def attention_gate_kernel(xg_ref, w_ref, bg_ref, wpsi_ref, bpsi_ref,
                          uh_ref, uwt_ref, x_ref, o_ref, a_sc):
    s = pl.program_id(1)
    n_s = pl.num_programs(1) - 1            # number of half-res row tiles (extra flush step)
    tm = xg_ref.shape[1]
    Ho, Wo = a_sc.shape
    rpt = tm // Wo                          # half-res rows per attention tile

    # Zero the persistent attention scratch at the start of every batch element so the
    # (exactly-zero-weighted) not-yet-computed rows never hold NaN/Inf garbage.
    @pl.when(s == 0)
    def _():
        a_sc[...] = jnp.zeros_like(a_sc)

    # ---- phase 1: attention logits for half-res row tile s --------------------------
    @pl.when(s < n_s)
    def _():
        # fused gate matmul: [xpatches | gpatches] @ [wx ; 0.25*wg]  (bf16 ops, f32 acc)
        f = jnp.dot(xg_ref[0], w_ref[...], preferred_element_type=jnp.float32)
        f = jnp.maximum(f + bg_ref[...], 0.0)                       # [tm, Co_pad]
        # psi 1x1 conv -> one logit per position: VPU multiply + lane reduction.
        # Split the row dim first (minor dim untouched -> cheap reshape) so the result
        # lands directly in lane-dense (rpt, Wo) layout.
        f3 = f.reshape(rpt, Wo, f.shape[-1])
        logit = jnp.sum(f3 * wpsi_ref[...], axis=-1) + bpsi_ref[0, 0]   # [rpt, Wo]
        row0 = pl.multiple_of(s * rpt, rpt)
        a_sc[pl.ds(row0, rpt), :] = jax.nn.sigmoid(logit)

    # ---- phase 2: x2 bilinear upsample + gating for out row tile t = s - 1 ----------
    # One-step lag: out rows [2*t*rpt, 2*(t+1)*rpt) need half-res rows <= (t+1)*rpt,
    # the last of which phase 1 wrote THIS step.  uh coefficients for rows beyond that
    # are exactly 0, so using the full scratch A is exact.
    @pl.when(s > 0)
    def _():
        a_half = jnp.dot(uh_ref[...], a_sc[...],
                         preferred_element_type=jnp.float32)        # [2*rpt, Wo]
        a_up = jnp.dot(a_half, uwt_ref[...],
                       preferred_element_type=jnp.float32)          # [2*rpt, W]
        o_ref[...] = (a_up[None, None, :, :] * x_ref[...]).astype(o_ref.dtype)


# ----------------------------- host-side helpers --------------------------------------
def _bilinear_matrix(out_size: int, in_size: int) -> np.ndarray:
    """F.interpolate(mode='bilinear', align_corners=False) along one axis, as a matrix."""
    u = np.zeros((out_size, in_size), dtype=np.float32)
    scale = in_size / out_size
    for d in range(out_size):
        src = max((d + 0.5) * scale - 0.5, 0.0)
        i0 = min(int(np.floor(src)), in_size - 1)
        i1 = min(i0 + 1, in_size - 1)
        l1 = src - i0
        u[d, i0] += 1.0 - l1
        u[d, i1] += l1
    return u


def _vmem_capacity_bytes() -> int:
    try:
        return int(pltpu.get_tpu_info().vmem_capacity_bytes)
    except Exception:
        return 64 * 1024 * 1024  # conservative (v7x per-TC)


def _pick_rows_per_tile(Ho, Wo, K, Cx, W, x_itemsize, Co_pad, budget, max_tm):
    """Largest half-res-row count r (divisor of Ho, layout-legal) fitting the VMEM budget."""
    cands = []
    for r in range(Ho, 0, -1):
        if Ho % r:
            continue
        tm = r * Wo
        # (8,128) legality: 2r rows of the NCHW x/out block and tm rows of the patch block
        if not (r == Ho or ((2 * r) % 8 == 0 and tm % 8 == 0)):
            continue
        cands.append(r)
    if not cands:
        return Ho
    consts = 2 * (K * Co_pad * 2 + 2 * Co_pad * 4 + Wo * W * 4) + Ho * Wo * 4
    for r in cands:                         # descending -> first fit is the largest
        tm = r * Wo
        est = consts + 2 * (tm * K * 2                       # xg tile (bf16, dbl-buffered)
                            + 2 * Cx * 2 * r * W * x_itemsize  # x + out tiles
                            + 2 * r * Ho * 4)                  # uh row tile
        if tm <= max_tm and est <= budget:
            return r
    return cands[-1]                        # best effort for tiny / extreme shapes


def attention_gate(x, g, params, *, row_tile=None):
    """x: [B, Cx, H, W], g: [B, Cg, H, W]  ->  [B, Cx, H, W]  (NCHW, dtype of x)."""
    B, Cx, H, W = x.shape
    Bg, Cg, Hg, Wg = g.shape
    assert (Bg, Hg, Wg) == (B, H, W), "AttentionGate assumes x and g share batch/spatial dims"
    assert H % 2 == 0 and W % 2 == 0, "even spatial dims required for the k=2/s=2 conv"
    Co = params["wx"].shape[0]
    Ho, Wo = H // 2, W // 2
    Nper = Ho * Wo
    K = 4 * (Cx + Cg)
    Co_pad = ((Co + 127) // 128) * 128       # pad gate/psi channel dim to full lanes

    vmem_cap = _vmem_capacity_bytes()
    vmem_limit = min(vmem_cap * 3 // 4, 100 * 1024 * 1024)   # ~96 MiB v5e/v6e, 48 MiB v7x
    if row_tile is None:
        row_tile = 1024 if vmem_cap <= 64 * 1024 * 1024 else 2048

    r = _pick_rows_per_tile(Ho, Wo, K, Cx, W, x.dtype.itemsize, Co_pad,
                            budget=int(vmem_limit * 0.6), max_tm=row_tile)
    tm = r * Wo
    n_s = Ho // r

    # --- 2x2/stride-2 patches (channels-last within a cell), x|g concatenated --------
    # row = ho*Wo + wo ; col = (kh*2 + kw)*C + c for each of x then g; bf16 for MXU/HBM.
    xp = (x.reshape(B, Cx, Ho, 2, Wo, 2)
            .transpose(0, 2, 4, 3, 5, 1)
            .reshape(B, Nper, 4 * Cx))
    gp = (g.reshape(B, Cg, Ho, 2, Wo, 2)
            .transpose(0, 2, 4, 3, 5, 1)
            .reshape(B, Nper, 4 * Cg))
    xg = jnp.concatenate([xp, gp], axis=-1).astype(jnp.bfloat16)        # [B, Nper, K]

    # --- stacked weight matrix, Co zero-padded to full lanes --------------------------
    wx_mat = params["wx"].transpose(2, 3, 1, 0).reshape(4 * Cx, Co)      # [4*Cx, Co]
    wg_t = params["wg"].reshape(Co, Cg).T                                # [Cg, Co]
    wg_mat = jnp.tile(wg_t, (4, 1)) * 0.25                               # fold 2x2 avg-pool
    w = jnp.concatenate([wx_mat, wg_mat], axis=0)                        # [K, Co]
    w = jnp.pad(w, ((0, 0), (0, Co_pad - Co))).astype(jnp.bfloat16)
    bg = jnp.pad(params["bg"].reshape(1, Co),
                 ((0, 0), (0, Co_pad - Co))).astype(jnp.float32)
    wpsi = jnp.pad(params["wpsi"].reshape(1, Co),
                   ((0, 0), (0, Co_pad - Co))).astype(jnp.float32)
    bpsi = params["bpsi"].reshape(1, 1).astype(jnp.float32)              # -> SMEM scalar

    # --- separable x2 bilinear upsample matrices (exact, tiny, kept f32) --------------
    uh = jnp.asarray(_bilinear_matrix(H, Ho))        # [H, Ho]
    uwt = jnp.asarray(_bilinear_matrix(W, Wo).T)     # [Wo, W]

    s_last = n_s - 1
    grid = (B, n_s + 1)                              # +1 flush step writes the last out tile

    out = pl.pallas_call(
        attention_gate_kernel,
        out_shape=jax.ShapeDtypeStruct((B, Cx, H, W), x.dtype),
        grid=grid,
        in_specs=[
            # patch tile for attention phase (clamped on the final flush step)
            pl.BlockSpec((1, tm, K), lambda b, s: (b, jnp.minimum(s, s_last), 0)),
            pl.BlockSpec((K, Co_pad), lambda b, s: (0, 0)),
            pl.BlockSpec((1, Co_pad), lambda b, s: (0, 0)),
            pl.BlockSpec((1, Co_pad), lambda b, s: (0, 0)),
            pl.BlockSpec(memory_space=pltpu.MemorySpace.SMEM),              # bpsi scalar
            # uh row tile for the lagged gating phase (t = s-1)
            pl.BlockSpec((2 * r, Ho), lambda b, s: (jnp.maximum(s - 1, 0), 0)),
            pl.BlockSpec((Wo, W), lambda b, s: (0, 0)),
            # x rows matching out tile t = s-1
            pl.BlockSpec((1, Cx, 2 * r, W), lambda b, s: (b, 0, jnp.maximum(s - 1, 0), 0)),
        ],
        out_specs=pl.BlockSpec((1, Cx, 2 * r, W),
                               lambda b, s: (b, 0, jnp.maximum(s - 1, 0), 0)),
        scratch_shapes=[pltpu.VMEM((Ho, Wo), jnp.float32)],
        compiler_params=pltpu.CompilerParams(
            # s MUST stay "arbitrary": the scratch carries state and out tile t=s-1 is
            # written one step late (see fragility note at top of file).
            dimension_semantics=("parallel", "arbitrary"),
            vmem_limit_bytes=int(vmem_limit),
        ),
    )(xg, w, bg, wpsi, bpsi, uh, uwt, x)
    return out


# ----------------------------- pure-JAX reference (spec) ------------------------------
def attention_gate_reference(x, g, params):
    B, Cx, H, W = x.shape
    Cg = g.shape[1]
    Co = params["wx"].shape[0]
    Ho, Wo = H // 2, W // 2
    w_x = jax.lax.conv_general_dilated(
        x, params["wx"], window_strides=(2, 2), padding="VALID",
        dimension_numbers=("NCHW", "OIHW", "NCHW"))
    w_g = jnp.einsum("oc,bchw->bohw", params["wg"].reshape(Co, Cg), g) \
        + params["bg"].reshape(1, Co, 1, 1)
    dh = jnp.asarray(_bilinear_matrix(Ho, H))
    dw = jnp.asarray(_bilinear_matrix(Wo, W))
    w_g_d = jnp.einsum("ph,bchw,qw->bcpq", dh, w_g, dw)
    f = jax.nn.relu(w_x + w_g_d)
    a = jax.nn.sigmoid(
        jnp.einsum("oc,bcpq->bopq", params["wpsi"].reshape(1, Co), f)
        + params["bpsi"].reshape(1, 1, 1, 1))
    uh = jnp.asarray(_bilinear_matrix(H, Ho))
    uw = jnp.asarray(_bilinear_matrix(W, Wo))
    a_up = jnp.einsum("hp,bopq,wq->bohw", uh, a, uw)
    return a_up * x


def init_params(key, in_chans_x, in_chans_g, out_chans):
    k1, k2, k3, k4, k5 = jax.random.split(key, 5)
    return {
        "wx": 0.1 * jax.random.normal(k1, (out_chans, in_chans_x, 2, 2), jnp.float32),
        "wg": 0.1 * jax.random.normal(k2, (out_chans, in_chans_g, 1, 1), jnp.float32),
        "bg": 0.1 * jax.random.normal(k3, (out_chans,), jnp.float32),
        "wpsi": 0.1 * jax.random.normal(k4, (1, out_chans, 1, 1), jnp.float32),
        "bpsi": 0.1 * jax.random.normal(k5, (1,), jnp.float32),
    }


if __name__ == "__main__":
    B, Cx, Cg, Co, H, W = 2, 4, 6, 8, 32, 32
    key = jax.random.PRNGKey(0)
    kx, kg, kp = jax.random.split(key, 3)
    x = jax.random.normal(kx, (B, Cx, H, W), jnp.float32)
    g = jax.random.normal(kg, (B, Cg, H, W), jnp.float32)
    params = init_params(kp, Cx, Cg, Co)

    fn = jax.jit(attention_gate)
    out = jax.block_until_ready(fn(x, g, params))

    assert out.shape == (B, Cx, H, W), out.shape
    assert bool(jnp.all(jnp.isfinite(out)))
    ref = attention_gate_reference(x, g, params)
    np.testing.assert_allclose(np.asarray(out), np.asarray(ref), atol=2e-2, rtol=2e-2)
    print("KERNEL_OK")
</pallas_src>

<mosaic_0001>
module attributes {stable_mosaic.version = 11 : i64} {
  func.func @attention_gate_kernel(%arg0: i32, %arg1: i32, %arg2: memref<1x256x40xbf16, #tpu.memory_space<vmem>>, %arg3: memref<40x128xbf16, #tpu.memory_space<vmem>>, %arg4: memref<1x128xf32, #tpu.memory_space<vmem>>, %arg5: memref<1x128xf32, #tpu.memory_space<vmem>>, %arg6: memref<1x1xf32, #tpu.memory_space<smem>>, %arg7: memref<32x16xf32, #tpu.memory_space<vmem>>, %arg8: memref<16x32xf32, #tpu.memory_space<vmem>>, %arg9: memref<1x4x32x32xf32, #tpu.memory_space<vmem>>, %arg10: memref<1x4x32x32xf32, #tpu.memory_space<vmem>>, %arg11: memref<16x16xf32, #tpu.memory_space<vmem>>) attributes {dimension_semantics = [#tpu.dimension_semantics<parallel>, #tpu.dimension_semantics<arbitrary>], iteration_bounds = array<i64: 2, 2>, scalar_prefetch = 0 : i64, scratch_operands = 1 : i64, tpu.core_type = #tpu.core_type<tc>, window_params = [{transform_indices = @transform_0, window_bounds = array<i64: 1, 256, 40>}, {pipeline_mode = #tpu.pipeline_mode<synchronous>, transform_indices = @transform_1, window_bounds = array<i64: 40, 128>}, {pipeline_mode = #tpu.pipeline_mode<synchronous>, transform_indices = @transform_2, window_bounds = array<i64: 1, 128>}, {pipeline_mode = #tpu.pipeline_mode<synchronous>, transform_indices = @transform_3, window_bounds = array<i64: 1, 128>}, {transform_indices = @transform_4, window_bounds = array<i64: 1, 1>}, {transform_indices = @transform_5, window_bounds = array<i64: 32, 16>}, {pipeline_mode = #tpu.pipeline_mode<synchronous>, transform_indices = @transform_6, window_bounds = array<i64: 16, 32>}, {transform_indices = @transform_7, window_bounds = array<i64: 1, 4, 32, 32>}, {transform_indices = @transform_8, window_bounds = array<i64: 1, 4, 32, 32>}]} {
    %c0_i32 = arith.constant 0 : i32
    %0 = arith.cmpi eq, %arg1, %c0_i32 : i32
    %1 = arith.extui %0 : i1 to i32
    %c0_i32_0 = arith.constant 0 : i32
    %2 = arith.cmpi ne, %1, %c0_i32_0 : i32
    scf.if %2 {
      %cst = arith.constant 0.000000e+00 : f32
      %9 = vector.broadcast %cst : f32 to vector<16x16xf32>
      %c0 = arith.constant 0 : index
      %c0_4 = arith.constant 0 : index
      %10 = vector.load %arg11[%c0, %c0_4] : memref<16x16xf32, #tpu.memory_space<vmem>>, vector<16x16xf32>
      tpu.vector_store %arg11[%c0, %c0_4], %9 {strides = array<i32>} : memref<16x16xf32, #tpu.memory_space<vmem>>, vector<16x16xf32>,
    } else {
    }
    %c1_i32 = arith.constant 1 : i32
    %3 = arith.cmpi slt, %arg1, %c1_i32 : i32
    %4 = arith.extui %3 : i1 to i32
    %c0_i32_1 = arith.constant 0 : i32
    %5 = arith.cmpi ne, %4, %c0_i32_1 : i32
    scf.if %5 {
      %c0 = arith.constant 0 : index
      %c0_4 = arith.constant 0 : index
      %c0_5 = arith.constant 0 : index
      %9 = vector.load %arg2[%c0, %c0_4, %c0_5] : memref<1x256x40xbf16, #tpu.memory_space<vmem>>, vector<1x256x40xbf16>
      %10 = vector.shape_cast %9 : vector<1x256x40xbf16> to vector<256x40xbf16>
      %c0_6 = arith.constant 0 : index
      %c0_7 = arith.constant 0 : index
      %11 = vector.load %arg3[%c0_6, %c0_7] : memref<40x128xbf16, #tpu.memory_space<vmem>>, vector<40x128xbf16>
      %cst = arith.constant dense<0.000000e+00> : vector<256x128xf32>
      %12 = tpu.matmul %10, %11, %cst {dimension_numbers = #tpu.dot_dimension_numbers<[1], [0], [0], [1], [0, 0, 1, 1], [], []>} : vector<256x40xbf16>, vector<40x128xbf16>, vector<256x128xf32> -> vector<256x128xf32>
      %c0_8 = arith.constant 0 : index
      %c0_9 = arith.constant 0 : index
      %13 = vector.load %arg4[%c0_8, %c0_9] : memref<1x128xf32, #tpu.memory_space<vmem>>, vector<1x128xf32>
      %14 = vector.broadcast %13 : vector<1x128xf32> to vector<256x128xf32>
      %15 = arith.addf %12, %14 : vector<256x128xf32>
      %cst_10 = arith.constant 0.000000e+00 : f32
      %16 = vector.broadcast %cst_10 : f32 to vector<256x128xf32>
      %17 = arith.maximumf %15, %16 : vector<256x128xf32>
      %18 = vector.shape_cast %17 : vector<256x128xf32> to vector<16x16x128xf32>
      %c0_11 = arith.constant 0 : index
      %c0_12 = arith.constant 0 : index
      %19 = vector.load %arg5[%c0_11, %c0_12] : memref<1x128xf32, #tpu.memory_space<vmem>>, vector<1x128xf32>
      %20 = vector.shape_cast %19 : vector<1x128xf32> to vector<1x1x128xf32>
      %21 = vector.broadcast %20 : vector<1x1x128xf32> to vector<16x16x128xf32>
      %22 = arith.mulf %18, %21 : vector<16x16x128xf32>
      %cst_13 = arith.constant dense<0.000000e+00> : vector<16x16xf32>
      %23 = vector.multi_reduction <add>, %22, %cst_13 [2] : vector<16x16x128xf32> to vector<16x16xf32>
      %c0_14 = arith.constant 0 : index
      %c0_15 = arith.constant 0 : index
      %24 = memref.load %arg6[%c0_14, %c0_15] : memref<1x1xf32, #tpu.memory_space<smem>>
      %25 = vector.broadcast %24 : f32 to vector<16x16xf32>
      %26 = arith.addf %23, %25 : vector<16x16xf32>
      %c16_i32 = arith.constant 16 : i32
      %27 = arith.muli %arg1, %c16_i32 : i32
      %28 = tpu.assume_multiple %27, 16 : i32
      %29 = arith.negf %26 : vector<16x16xf32>
      %30 = math.exp %29 : vector<16x16xf32>
      %cst_16 = arith.constant 1.000000e+00 : f32
      %31 = vector.broadcast %cst_16 : f32 to vector<16x16xf32>
      %32 = arith.addf %31, %30 : vector<16x16xf32>
      %33 = arith.divf %31, %32 : vector<16x16xf32>
      %34 = arith.index_cast %28 : i32 to index
      %c0_17 = arith.constant 0 : index
      %35 = vector.load %arg11[%34, %c0_17] : memref<16x16xf32, #tpu.memory_space<vmem>>, vector<16x16xf32>
      tpu.vector_store %arg11[%34, %c0_17], %33 {strides = array<i32>} : memref<16x16xf32, #tpu.memory_space<vmem>>, vector<16x16xf32>,
    } else {
    }
    %c0_i32_2 = arith.constant 0 : i32
    %6 = arith.cmpi sgt, %arg1, %c0_i32_2 : i32
    %7 = arith.extui %6 : i1 to i32
    %c0_i32_3 = arith.constant 0 : i32
    %8 = arith.cmpi ne, %7, %c0_i32_3 : i32
    scf.if %8 {
      %c0 = arith.constant 0 : index
      %c0_4 = arith.constant 0 : index
      %9 = vector.load %arg7[%c0, %c0_4] : memref<32x16xf32, #tpu.memory_space<vmem>>, vector<32x16xf32>
      %c0_5 = arith.constant 0 : index
      %c0_6 = arith.constant 0 : index
      %10 = vector.load %arg11[%c0_5, %c0_6] : memref<16x16xf32, #tpu.memory_space<vmem>>, vector<16x16xf32>
      %cst = arith.constant dense<0.000000e+00> : vector<32x16xf32>
      %11 = tpu.matmul %9, %10, %cst {dimension_numbers = #tpu.dot_dimension_numbers<[1], [0], [0], [1], [0, 0, 1, 1], [], []>} : vector<32x16xf32>, vector<16x16xf32>, vector<32x16xf32> -> vector<32x16xf32>
      %c0_7 = arith.constant 0 : index
      %c0_8 = arith.constant 0 : index
      %12 = vector.load %arg8[%c0_7, %c0_8] : memref<16x32xf32, #tpu.memory_space<vmem>>, vector<16x32xf32>
      %cst_9 = arith.constant dense<0.000000e+00> : vector<32x32xf32>
      %13 = tpu.matmul %11, %12, %cst_9 {dimension_numbers = #tpu.dot_dimension_numbers<[1], [0], [0], [1], [0, 0, 1, 1], [], []>} : vector<32x16xf32>, vector<16x32xf32>, vector<32x32xf32> -> vector<32x32xf32>
      %14 = vector.shape_cast %13 : vector<32x32xf32> to vector<1x1x32x32xf32>
      %c0_10 = arith.constant 0 : index
      %c0_11 = arith.constant 0 : index
      %c0_12 = arith.constant 0 : index
      %c0_13 = arith.constant 0 : index
      %15 = vector.load %arg9[%c0_10, %c0_11, %c0_12, %c0_13] : memref<1x4x32x32xf32, #tpu.memory_space<vmem>>, vector<1x4x32x32xf32>
      %16 = vector.broadcast %14 : vector<1x1x32x32xf32> to vector<1x4x32x32xf32>
      %17 = arith.mulf %16, %15 : vector<1x4x32x32xf32>
      %c0_14 = arith.constant 0 : index
      %c0_15 = arith.constant 0 : index
      %c0_16 = arith.constant 0 : index
      %c0_17 = arith.constant 0 : index
      %18 = vector.load %arg10[%c0_14, %c0_15, %c0_16, %c0_17] : memref<1x4x32x32xf32, #tpu.memory_space<vmem>>, vector<1x4x32x32xf32>
      tpu.vector_store %arg10[%c0_14, %c0_15, %c0_16, %c0_17], %17 {strides = array<i32>} : memref<1x4x32x32xf32, #tpu.memory_space<vmem>>, vector<1x4x32x32xf32>,
    } else {
    }
    return
  }
  func.func @transform_0(%arg0: i32, %arg1: i32) -> (i32, i32, i32) {
    %c0_i32 = arith.constant 0 : i32
    %0 = arith.minsi %arg1, %c0_i32 : i32
    %c0_i32_0 = arith.constant 0 : i32
    %c0_i32_1 = arith.constant 0 : i32
    return %arg0, %0, %c0_i32_0 : i32, i32, i32
  }
  func.func @transform_1(%arg0: i32, %arg1: i32) -> (i32, i32) {
    %c0_i32 = arith.constant 0 : i32
    %c0_i32_0 = arith.constant 0 : i32
    %c0_i32_1 = arith.constant 0 : i32
    return %c0_i32, %c0_i32_0 : i32, i32
  }
  func.func @transform_2(%arg0: i32, %arg1: i32) -> (i32, i32) {
    %c0_i32 = arith.constant 0 : i32
    %c0_i32_0 = arith.constant 0 : i32
    %c0_i32_1 = arith.constant 0 : i32
    return %c0_i32, %c0_i32_0 : i32, i32
  }
  func.func @transform_3(%arg0: i32, %arg1: i32) -> (i32, i32) {
    %c0_i32 = arith.constant 0 : i32
    %c0_i32_0 = arith.constant 0 : i32
    %c0_i32_1 = arith.constant 0 : i32
    return %c0_i32, %c0_i32_0 : i32, i32
  }
  func.func @transform_4(%arg0: i32, %arg1: i32) -> (i32, i32) {
    %c0_i32 = arith.constant 0 : i32
    %c0_i32_0 = arith.constant 0 : i32
    %c0_i32_1 = arith.constant 0 : i32
    return %c0_i32, %c0_i32_0 : i32, i32
  }
  func.func @transform_5(%arg0: i32, %arg1: i32) -> (i32, i32) {
    %c1_i32 = arith.constant 1 : i32
    %0 = arith.subi %arg1, %c1_i32 : i32
    %c0_i32 = arith.constant 0 : i32
    %1 = arith.maxsi %0, %c0_i32 : i32
    %c0_i32_0 = arith.constant 0 : i32
    %c0_i32_1 = arith.constant 0 : i32
    return %1, %c0_i32_0 : i32, i32
  }
  func.func @transform_6(%arg0: i32, %arg1: i32) -> (i32, i32) {
    %c0_i32 = arith.constant 0 : i32
    %c0_i32_0 = arith.constant 0 : i32
    %c0_i32_1 = arith.constant 0 : i32
    return %c0_i32, %c0_i32_0 : i32, i32
  }
  func.func @transform_7(%arg0: i32, %arg1: i32) -> (i32, i32, i32, i32) {
    %c1_i32 = arith.constant 1 : i32
    %0 = arith.subi %arg1, %c1_i32 : i32
    %c0_i32 = arith.constant 0 : i32
    %1 = arith.maxsi %0, %c0_i32 : i32
    %c0_i32_0 = arith.constant 0 : i32
    %c0_i32_1 = arith.constant 0 : i32
    %c0_i32_2 = arith.constant 0 : i32
    return %arg0, %c0_i32_0, %1, %c0_i32_1 : i32, i32, i32, i32
  }
  func.func @transform_8(%arg0: i32, %arg1: i32) -> (i32, i32, i32, i32) {
    %c1_i32 = arith.constant 1 : i32
    %0 = arith.subi %arg1, %c1_i32 : i32
    %c0_i32 = arith.constant 0 : i32
    %1 = arith.maxsi %0, %c0_i32 : i32
    %c0_i32_0 = arith.constant 0 : i32
    %c0_i32_1 = arith.constant 0 : i32
    %c0_i32_2 = arith.constant 0 : i32
    return %arg0, %c0_i32_0, %1, %c0_i32_1 : i32, i32, i32, i32
  }
}

</mosaic_0001>

<llo_original>
// kernel: attention_gate.1
$region0: #{attention_gate.1}
  #allocation0 [shape = 'u32[]', space=smem, size = 0x4, offset = 0x4, fixed_abs, tag = 'smem constant byte address 0x4 - core index']
  #allocation1 [shape = 'u32[144,128]{1,0:T(1,128)}', space=vmem, size = 0x12000, scoped, tag = 'internal scratch']
  #allocation2 [shape = 'f32[16,16]{1,0:T(8,128)}', space=vmem, size = 0x2000, scoped, tag = 'scratch operand']
  #allocation3 [shape = 'f32[1,1]{1,0:T(1,128)S(6)}', space=smem, size = 0x200, scoped, tag = 'scoped memory for attention_gate.1']
  %s0 = inlined_call_operand.vmem [shape: bf16[2,256,40], index: 0, kind: input, shape index: {}]
  %s1 = inlined_call_operand.vmem [shape: bf16[40,128], index: 1, kind: input, shape index: {}]
  %s2 = inlined_call_operand.vmem [shape: f32[1,128], index: 2, kind: input, shape index: {}]
  %s3 = inlined_call_operand.vmem [shape: f32[1,128], index: 3, kind: input, shape index: {}]
  %s4 = inlined_call_operand.<no memory space> [shape: f32[1,1], index: 4, kind: input, shape index: {}]
  %s5 = inlined_call_operand.vmem [shape: f32[32,16], index: 5, kind: input, shape index: {}]
  %s6 = inlined_call_operand.vmem [shape: f32[16,32], index: 6, kind: input, shape index: {}]
  %s7 = inlined_call_operand.vmem [shape: f32[2,4,32,32], index: 7, kind: input, shape index: {}]
  %s8 = inlined_call_operand.hbm [shape: f32[2,4,32,32], index: 8, kind: output, shape index: {}]
  %s9 = sld [smem:[#allocation0]]
  $region77: #{attention_gate.1} parent=0
    _
  %s11 = ssub.s32 1, %s9
  %s12 = scalar_select 0, %s11, %s9
  %13 = sst [smem:[#allocation3]] %s4
  $region1: #{attention_gate.1} parent=0
    #allocation4 [shape = 'u8[131072]{0}', space=vmem, size = 0x20000, scoped, tag = 'output window, operand 0']
    #allocation5 [shape = 's32[2]{0}', space=sflag, size = 0x8, scoped, tag = 'scoped memory for attention_gate.1']
    %14 = vsyncpa [#allocation5], 0
    %s15 = scalar_lea.sflag [#allocation5], 1
    %16 = vsyncpa %s15, 0
    loop: start=0, step=1, limit=6
    $region2: #{attention_gate.1} parent=1 // loop_pre_header
      _
    $region3: #{attention_gate.1} parent=1 // loop_header
      %s18 = sphi 0, %s22
      %p19 = scmp.ge.s32.totalorder %s18, 6
      %s25 = sphi 0, %s37
      %s26 = sphi 0, %s33
      %s27 = sphi 0, %s25
      %s28 = sphi 0, %s26
      %s29 = sphi 0, %s27
      %s30 = sphi 0, %s28
      %s46 = sphi 0, %s48
      %s49 = sphi 0, %s46
      %s50 = sphi 0, %s49
      %s66 = sphi 0, %s50
      %s70 = sphi 0, %s70
      %s72 = sphi 0, %s70
      %s73 = sphi 0, %s72
      %s87 = sphi 0, %s73
      %s91 = sphi 0, %s91
      %s93 = sphi 0, %s91
      %s94 = sphi 0, %s93
      %s108 = sphi 0, %s94
      %s112 = sphi 0, %s112
      %s114 = sphi 0, %s112
      %s115 = sphi 0, %s114
      %s129 = sphi 0, %s115
      %s133 = sphi 0, %s133
      %s135 = sphi 0, %s133
      %s136 = sphi 0, %s135
      %s150 = sphi 0, %s136
      %s162 = sphi 0, %s164
      %s165 = sphi 0, %s162
      %s166 = sphi 0, %s165
      %s182 = sphi 0, %s166
      %s186 = sphi 0, %s186
      %s188 = sphi 0, %s186
      %s189 = sphi 0, %s188
      %s203 = sphi 0, %s189
      %s217 = sphi 0, %s219
      %s220 = sphi 0, %s217
      %s221 = sphi 0, %s220
      %s237 = sphi 0, %s221
      %s251 = sphi 0, %s253
      %s254 = sphi 0, %s251
      %s255 = sphi 0, %s254
      %s271 = sphi 0, %s255
    $region4: #{attention_gate.1} parent=1 // loop_header_branch
      %21 = sbr.rel (%p19) target = $region8
    $region5: #{attention_gate.1} parent=1 // loop_body
      %s23 = ssub.s32 %s18, 1
      %s24 = ssub.s32 %s18, 2
      %s31 = sadd.s32 1, %s26
      %p32 = scmp.ge.s32.totalorder %s31, 2
      %s33 = scalar_select %p32, 0, %s31
      %s34 = sadd.s32 1, %s25
      %s35 = scalar_select %p32, %s34, %s25
      %p36 = scmp.ge.s32.totalorder %s35, 2
      %s37 = scalar_select %p36, 0, %s35
      %p38 = scmp.lt.s32.totalorder %s26, 0
      %s39 = scalar_select %p38, %s26, 0
      %p40 = scmp.lt.s32.totalorder %s33, 0
      %s41 = scalar_select %p40, %s33, 0
      %s42 = ssub.s32 %s25, %s37
      %s43 = ssub.s32 %s39, %s41
      %s44 = sor.u32 %s42, %s43
      %p45 = scmp.eq.s32.totalorder %s44, 0
      %s47 = sadd.s32 %s46, 1
      %s48 = scalar_select %p45, %s46, %s47
      %p51 = pneg %p45
      %p52 = scmp.eq.s32.totalorder %s18, 3
      %p53 = por %p51, %p52
      %p54 = scmp.ne.s32.totalorder %s46, %s49
      %p55 = scmp.eq.s32.totalorder %s18, 0
      %p56 = por %p54, %p55
      %p57 = scmp.ne.s32.totalorder %s46, %s49
      %p58 = scmp.eq.s32.totalorder %s23, 3
      %p59 = por %p57, %p58
      %p60 = scmp.ne.s32.totalorder %s49, %s50
      %p61 = scmp.eq.s32.totalorder %s23, 0
      %p62 = por %p60, %p61
      %p63 = scmp.ne.s32.totalorder %s49, %s50
      %p64 = scmp.eq.s32.totalorder %s24, 3
      %p65 = por %p63, %p64
      %p67 = scmp.ne.s32.totalorder %s50, %s66
      %p68 = scmp.eq.s32.totalorder %s24, 0
      %p69 = por %p67, %p68
      %s71 = sadd.s32 %s70, 1
      %p74 = scmp.eq.s32.totalorder %s18, 3
      %p75 = scmp.ne.s32.totalorder %s70, %s72
      %p76 = scmp.eq.s32.totalorder %s18, 0
      %p77 = por %p75, %p76
      %p78 = scmp.ne.s32.totalorder %s70, %s72
      %p79 = scmp.eq.s32.totalorder %s23, 3
      %p80 = por %p78, %p79
      %p81 = scmp.ne.s32.totalorder %s72, %s73
      %p82 = scmp.eq.s32.totalorder %s23, 0
      %p83 = por %p81, %p82
      %p84 = scmp.ne.s32.totalorder %s72, %s73
      %p85 = scmp.eq.s32.totalorder %s24, 3
      %p86 = por %p84, %p85
      %p88 = scmp.ne.s32.totalorder %s73, %s87
      %p89 = scmp.eq.s32.totalorder %s24, 0
      %p90 = por %p88, %p89
      %s92 = sadd.s32 %s91, 1
      %p95 = scmp.eq.s32.totalorder %s18, 3
      %p96 = scmp.ne.s32.totalorder %s91, %s93
      %p97 = scmp.eq.s32.totalorder %s18, 0
      %p98 = por %p96, %p97
      %p99 = scmp.ne.s32.totalorder %s91, %s93
      %p100 = scmp.eq.s32.totalorder %s23, 3
      %p101 = por %p99, %p100
      %p102 = scmp.ne.s32.totalorder %s93, %s94
      %p103 = scmp.eq.s32.totalorder %s23, 0
      %p104 = por %p102, %p103
      %p105 = scmp.ne.s32.totalorder %s93, %s94
      %p106 = scmp.eq.s32.totalorder %s24, 3
      %p107 = por %p105, %p106
      %p109 = scmp.ne.s32.totalorder %s94, %s108
      %p110 = scmp.eq.s32.totalorder %s24, 0
      %p111 = por %p109, %p110
      %s113 = sadd.s32 %s112, 1
      %p116 = scmp.eq.s32.totalorder %s18, 3
      %p117 = scmp.ne.s32.totalorder %s112, %s114
      %p118 = scmp.eq.s32.totalorder %s18, 0
      %p119 = por %p117, %p118
      %p120 = scmp.ne.s32.totalorder %s112, %s114
      %p121 = scmp.eq.s32.totalorder %s23, 3
      %p122 = por %p120, %p121
      %p123 = scmp.ne.s32.totalorder %s114, %s115
      %p124 = scmp.eq.s32.totalorder %s23, 0
      %p125 = por %p123, %p124
      %p126 = scmp.ne.s32.totalorder %s114, %s115
      %p127 = scmp.eq.s32.totalorder %s24, 3
      %p128 = por %p126, %p127
      %p130 = scmp.ne.s32.totalorder %s115, %s129
      %p131 = scmp.eq.s32.totalorder %s24, 0
      %p132 = por %p130, %p131
      %s134 = sadd.s32 %s133, 1
      %p137 = scmp.eq.s32.totalorder %s18, 3
      %p138 = scmp.ne.s32.totalorder %s133, %s135
      %p139 = scmp.eq.s32.totalorder %s18, 0
      %p140 = por %p138, %p139
      %p141 = scmp.ne.s32.totalorder %s133, %s135
      %p142 = scmp.eq.s32.totalorder %s23, 3
      %p143 = por %p141, %p142
      %p144 = scmp.ne.s32.totalorder %s135, %s136
      %p145 = scmp.eq.s32.totalorder %s23, 0
      %p146 = por %p144, %p145
      %p147 = scmp.ne.s32.totalorder %s135, %s136
      %p148 = scmp.eq.s32.totalorder %s24, 3
      %p149 = por %p147, %p148
      %p151 = scmp.ne.s32.totalorder %s136, %s150
      %p152 = scmp.eq.s32.totalorder %s24, 0
      %p153 = por %p151, %p152
      %s154 = ssub.s32 %s26, 1
      %p155 = scmp.gt.s32.totalorder %s154, 0
      %s156 = scalar_select %p155, %s154, 0
      %s157 = ssub.s32 %s33, 1
      %p158 = scmp.gt.s32.totalorder %s157, 0
      %s159 = scalar_select %p158, %s157, 0
      %s160 = ssub.s32 %s156, %s159
      %p161 = scmp.eq.s32.totalorder %s160, 0
      %s163 = sadd.s32 %s162, 1
      %s164 = scalar_select %p161, %s162, %s163
      %p167 = pneg %p161
      %p168 = scmp.eq.s32.totalorder %s18, 3
      %p169 = por %p167, %p168
      %p170 = scmp.ne.s32.totalorder %s162, %s165
      %p171 = scmp.eq.s32.totalorder %s18, 0
      %p172 = por %p170, %p171
      %p173 = scmp.ne.s32.totalorder %s162, %s165
      %p174 = scmp.eq.s32.totalorder %s23, 3
      %p175 = por %p173, %p174
      %p176 = scmp.ne.s32.totalorder %s165, %s166
      %p177 = scmp.eq.s32.totalorder %s23, 0
      %p178 = por %p176, %p177
      %p179 = scmp.ne.s32.totalorder %s165, %s166
      %p180 = scmp.eq.s32.totalorder %s24, 3
      %p181 = por %p179, %p180
      %p183 = scmp.ne.s32.totalorder %s166, %s182
      %p184 = scmp.eq.s32.totalorder %s24, 0
      %p185 = por %p183, %p184
      %s187 = sadd.s32 %s186, 1
      %p190 = scmp.eq.s32.totalorder %s18, 3
      %p191 = scmp.ne.s32.totalorder %s186, %s188
      %p192 = scmp.eq.s32.totalorder %s18, 0
      %p193 = por %p191, %p192
      %p194 = scmp.ne.s32.totalorder %s186, %s188
      %p195 = scmp.eq.s32.totalorder %s23, 3
      %p196 = por %p194, %p195
      %p197 = scmp.ne.s32.totalorder %s188, %s189
      %p198 = scmp.eq.s32.totalorder %s23, 0
      %p199 = por %p197, %p198
      %p200 = scmp.ne.s32.totalorder %s188, %s189
      %p201 = scmp.eq.s32.totalorder %s24, 3
      %p202 = por %p200, %p201
      %p204 = scmp.ne.s32.totalorder %s189, %s203
      %p205 = scmp.eq.s32.totalorder %s24, 0
      %p206 = por %p204, %p205
      %s207 = ssub.s32 %s26, 1
      %p208 = scmp.gt.s32.totalorder %s207, 0
      %s209 = scalar_select %p208, %s207, 0
      %s210 = ssub.s32 %s33, 1
      %p211 = scmp.gt.s32.totalorder %s210, 0
      %s212 = scalar_select %p211, %s210, 0
      %s213 = ssub.s32 %s25, %s37
      %s214 = ssub.s32 %s209, %s212
      %s215 = sor.u32 %s213, %s214
      %p216 = scmp.eq.s32.totalorder %s215, 0
      %s218 = sadd.s32 %s217, 1
      %s219 = scalar_select %p216, %s217, %s218
      %p222 = pneg %p216
      %p223 = scmp.eq.s32.totalorder %s18, 3
      %p224 = por %p222, %p223
      %p225 = scmp.ne.s32.totalorder %s217, %s220
      %p226 = scmp.eq.s32.totalorder %s18, 0
      %p227 = por %p225, %p226
      %p228 = scmp.ne.s32.totalorder %s217, %s220
      %p229 = scmp.eq.s32.totalorder %s23, 3
      %p230 = por %p228, %p229
      %p231 = scmp.ne.s32.totalorder %s220, %s221
      %p232 = scmp.eq.s32.totalorder %s23, 0
      %p233 = por %p231, %p232
      %p234 = scmp.ne.s32.totalorder %s220, %s221
      %p235 = scmp.eq.s32.totalorder %s24, 3
      %p236 = por %p234, %p235
      %p238 = scmp.ne.s32.totalorder %s221, %s237
      %p239 = scmp.eq.s32.totalorder %s24, 0
      %p240 = por %p238, %p239
      %s241 = ssub.s32 %s26, 1
      %p242 = scmp.gt.s32.totalorder %s241, 0
      %s243 = scalar_select %p242, %s241, 0
      %s244 = ssub.s32 %s33, 1
      %p245 = scmp.gt.s32.totalorder %s244, 0
      %s246 = scalar_select %p245, %s244, 0
      %s247 = ssub.s32 %s25, %s37
      %s248 = ssub.s32 %s243, %s246
      %s249 = sor.u32 %s247, %s248
      %p250 = scmp.eq.s32.totalorder %s249, 0
      %s252 = sadd.s32 %s251, 1
      %s253 = scalar_select %p250, %s251, %s252
      %p256 = pneg %p250
      %p257 = scmp.eq.s32.totalorder %s18, 3
      %p258 = por %p256, %p257
      %p259 = scmp.ne.s32.totalorder %s251, %s254
      %p260 = scmp.eq.s32.totalorder %s18, 0
      %p261 = por %p259, %p260
      %p262 = scmp.ne.s32.totalorder %s251, %s254
      %p263 = scmp.eq.s32.totalorder %s23, 3
      %p264 = por %p262, %p263
      %p265 = scmp.ne.s32.totalorder %s254, %s255
      %p266 = scmp.eq.s32.totalorder %s23, 0
      %p267 = por %p265, %p266
      %p268 = scmp.ne.s32.totalorder %s254, %s255
      %p269 = scmp.eq.s32.totalorder %s24, 3
      %p270 = por %p268, %p269
      %p272 = scmp.ne.s32.totalorder %s255, %s271
      %p273 = scmp.eq.s32.totalorder %s24, 0
      %p274 = por %p272, %p273
      %p275 = scmp.le.s32.totalorder 1, %s18
      %p276 = scmp.lt.s32.totalorder %s18, 5
      %p277 = pnand %p275, %p276
      %p278 = pneg %p277
      // Predicated region
      $region9: #{attention_gate.1} parent=5 // pred_check
        _
      $region10: #{attention_gate.1} parent=5 // pred_check_branch
        %280 = sbr.rel (%p277) target = $region12
      $region11: #{attention_gate.1} parent=5 // pred_region
        %s281 = ssub.s32 %s18, 1
        // Predicated region
        $region13: #{attention_gate.1} parent=11 // pred_check
          %p282 = pneg %p83
        $region14: #{attention_gate.1} parent=11 // pred_check_branch
          %284 = sbr.rel (%p282) target = $region16
        $region15: #{attention_gate.1} parent=11 // pred_region
          _
        $region16: #{attention_gate.1} parent=11 // pred_fallthru
          _
        // Predicated region
        $region17: #{attention_gate.1} parent=11 // pred_check
          %p285 = pneg %p104
        $region18: #{attention_gate.1} parent=11 // pred_check_branch
          %287 = sbr.rel (%p285) target = $region20
        $region19: #{attention_gate.1} parent=11 // pred_region
          _
        $region20: #{attention_gate.1} parent=11 // pred_fallthru
          _
        // Predicated region
        $region21: #{attention_gate.1} parent=11 // pred_check
          %p288 = pneg %p125
        $region22: #{attention_gate.1} parent=11 // pred_check_branch
          %290 = sbr.rel (%p288) target = $region24
        $region23: #{attention_gate.1} parent=11 // pred_region
          _
        $region24: #{attention_gate.1} parent=11 // pred_fallthru
          _
        // Predicated region
        $region25: #{attention_gate.1} parent=11 // pred_check
          %p291 = pneg %p146
        $region26: #{attention_gate.1} parent=11 // pred_check_branch
          %293 = sbr.rel (%p291) target = $region28
        $region27: #{attention_gate.1} parent=11 // pred_region
          _
        $region28: #{attention_gate.1} parent=11 // pred_fallthru
          _
        // Predicated region
        $region29: #{attention_gate.1} parent=11 // pred_check
          %p294 = pneg %p199
        $region30: #{attention_gate.1} parent=11 // pred_check_branch
          %296 = sbr.rel (%p294) target = $region32
        $region31: #{attention_gate.1} parent=11 // pred_region
          _
        $region32: #{attention_gate.1} parent=11 // pred_fallthru
          _
      $region12: #{attention_gate.1} parent=5 // pred_fallthru
        _
      %p297 = scmp.lt.s32.totalorder %s18, 4
      // Predicated region
      $region33: #{attention_gate.1} parent=5 // pred_check
        %p298 = pneg %p297
      $region34: #{attention_gate.1} parent=5 // pred_check_branch
        %300 = sbr.rel (%p298) target = $region36
      $region35: #{attention_gate.1} parent=5 // pred_region
        // Predicated region
        $region37: #{attention_gate.1} parent=35 // pred_check
          %p301 = pneg %p56
        $region38: #{attention_gate.1} parent=35 // pred_check_branch
          %303 = sbr.rel (%p301) target = $region40
        $region39: #{attention_gate.1} parent=35 // pred_region
          %p304 = scmp.lt.s32.totalorder %s26, 0
          %s305 = scalar_select %p304, %s26, 0
          %s306 = smul.u32 32, %s305
          %p307 = scmp.lt.s32.totalorder %s25, 1
          %s308 = scalar_select %p307, %s25, 1
          %p309 = scmp.lt.s32.totalorder %s306, 31
          %s310 = scalar_select %p309, %s306, 31
          %s311 = smul.addr %s308, 32
          %s312 = sadd.s32 %s310, %s311
          %s313 = smul.addr %s312, 4
          %s314 = scalar_lea.vmem %s0, %s313
          %p315 = scmp.lt.s32.totalorder %s26, 0
          %s316 = scalar_select %p315, %s26, 0
          %s317 = smul.u32 32, %s316
        $region40: #{attention_gate.1} parent=35 // pred_fallthru
          _
        // Predicated region
        $region41: #{attention_gate.1} parent=35 // pred_check
          %p318 = pneg %p172
        $region42: #{attention_gate.1} parent=35 // pred_check_branch
          %320 = sbr.rel (%p318) target = $region44
        $region43: #{attention_gate.1} parent=35 // pred_region
          %s321 = ssub.s32 %s26, 1
          %p322 = scmp.gt.s32.totalorder %s321, 0
          %s323 = scalar_select %p322, %s321, 0
          %s324 = smul.u32 4, %s323
          %p325 = scmp.lt.s32.totalorder %s324, 3
          %s326 = scalar_select %p325, %s324, 3
          %s327 = smul.addr %s326, 8
          %s328 = scalar_lea.vmem %s5, %s327
          %s329 = ssub.s32 %s26, 1
          %p330 = scmp.gt.s32.totalorder %s329, 0
          %s331 = scalar_select %p330, %s329, 0
          %s332 = smul.u32 4, %s331
        $region44: #{attention_gate.1} parent=35 // pred_fallthru
          _
        // Predicated region
        $region45: #{attention_gate.1} parent=35 // pred_check
          %p333 = pneg %p227
        $region46: #{attention_gate.1} parent=35 // pred_check_branch
          %335 = sbr.rel (%p333) target = $region48
        $region47: #{attention_gate.1} parent=35 // pred_region
          %s336 = ssub.s32 %s26, 1
          %p337 = scmp.gt.s32.totalorder %s336, 0
          %s338 = scalar_select %p337, %s336, 0
          %s339 = smul.u32 4, %s338
          %p340 = scmp.lt.s32.totalorder %s25, 1
          %s341 = scalar_select %p340, %s25, 1
          %p342 = scmp.lt.s32.totalorder %s339, 3
          %s343 = scalar_select %p342, %s339, 3
          %s344 = smul.addr %s341, 16
          %s345 = sadd.s32 %s343, %s344
          %s346 = smul.addr %s345, 8
          %s347 = scalar_lea.vmem %s7, %s346
          %s348 = ssub.s32 %s26, 1
          %p349 = scmp.gt.s32.totalorder %s348, 0
          %s350 = scalar_select %p349, %s348, 0
          %s351 = smul.u32 4, %s350
        $region48: #{attention_gate.1} parent=35 // pred_fallthru
          _
      $region36: #{attention_gate.1} parent=5 // pred_fallthru
        _
      %p352 = scmp.le.s32.totalorder 1, %s18
      %p353 = scmp.lt.s32.totalorder %s18, 5
      %p354 = pnand %p352, %p353
      %p355 = pneg %p354
      // Predicated region
      $region49: #{attention_gate.1} parent=5 // pred_check
        _
      $region50: #{attention_gate.1} parent=5 // pred_check_branch
        %357 = sbr.rel (%p354) target = $region52
      $region51: #{attention_gate.1} parent=5 // pred_region
        %s358 = ssub.s32 %s18, 1
        %p359 = scmp.lt.s32.totalorder %s28, 0
        %s360 = scalar_select %p359, %s28, 0
        %s361 = smul.u32 32, %s360
        %p362 = scmp.lt.s32.totalorder %s27, 1
        %s363 = scalar_select %p362, %s27, 1
        %p364 = scmp.lt.s32.totalorder %s361, 31
        %s365 = scalar_select %p364, %s361, 31
        %s366 = smul.addr %s363, 32
        %s367 = sadd.s32 %s365, %s366
        %s368 = smul.addr %s367, 4
        %s369 = scalar_lea.vmem %s0, %s368
        %p370 = pneg %p62
        %p371 = pneg %p59
        %p372 = pneg %p83
        %p373 = pneg %p80
        %p374 = pneg %p104
        %p375 = pneg %p101
        %p376 = pneg %p125
        %p377 = pneg %p122
        %p378 = pneg %p146
        %p379 = pneg %p143
        %s380 = ssub.s32 %s28, 1
        %p381 = scmp.gt.s32.totalorder %s380, 0
        %s382 = scalar_select %p381, %s380, 0
        %s383 = smul.u32 4, %s382
        %p384 = scmp.lt.s32.totalorder %s383, 3
        %s385 = scalar_select %p384, %s383, 3
        %s386 = smul.addr %s385, 8
        %s387 = scalar_lea.vmem %s5, %s386
        %p388 = pneg %p178
        %p389 = pneg %p175
        %p390 = pneg %p199
        %p391 = pneg %p196
        %s392 = ssub.s32 %s28, 1
        %p393 = scmp.gt.s32.totalorder %s392, 0
        %s394 = scalar_select %p393, %s392, 0
        %s395 = smul.u32 4, %s394
        %p396 = scmp.lt.s32.totalorder %s27, 1
        %s397 = scalar_select %p396, %s27, 1
        %p398 = scmp.lt.s32.totalorder %s395, 3
        %s399 = scalar_select %p398, %s395, 3
        %s400 = smul.addr %s397, 16
        %s401 = sadd.s32 %s399, %s400
        %s402 = smul.addr %s401, 8
        %s403 = scalar_lea.vmem %s7, %s402
        %p404 = pneg %p233
        %p405 = pneg %p230
        %p406 = pneg %p267
        %p407 = pneg %p264
        %s408 = sand.u32 %s254, 1
        %s409 = scalar_lea.sflag [#allocation5], %s408
        %s410 = sand.u32 %s254, 1
        %s411 = smul.addr %s410, 128
        %s412 = scalar_lea.vmem [#allocation4], %s411
        %p413 = scmp.lt.s32.totalorder %s28, 0
        %s414 = scalar_select %p413, %s28, 0
        %s415 = smul.u32 32, %s414
        %p416 = scmp.lt.s32.totalorder %s27, 1
        %s417 = scalar_select %p416, %s27, 1
        %p418 = scmp.lt.s32.totalorder %s415, 31
        %s419 = scalar_select %p418, %s415, 31
        %s420 = smul.addr %s417, 32
        %s421 = sadd.s32 %s419, %s420
        %s422 = smul.addr %s421, 4
        %s423 = scalar_lea.vmem %s0, %s422
        %p424 = scmp.lt.s32.totalorder %s28, 0
        %s425 = scalar_select %p424, %s28, 0
        %s426 = smul.u32 32, %s425
        %s427 = ssub.s32 %s28, 1
        %p428 = scmp.gt.s32.totalorder %s427, 0
        %s429 = scalar_select %p428, %s427, 0
        %s430 = smul.u32 4, %s429
        %p431 = scmp.lt.s32.totalorder %s430, 3
        %s432 = scalar_select %p431, %s430, 3
        %s433 = smul.addr %s432, 8
        %s434 = scalar_lea.vmem %s5, %s433
        %s435 = ssub.s32 %s28, 1
        %p436 = scmp.gt.s32.totalorder %s435, 0
        %s437 = scalar_select %p436, %s435, 0
        %s438 = smul.u32 4, %s437
        %s439 = ssub.s32 %s28, 1
        %p440 = scmp.gt.s32.totalorder %s439, 0
        %s441 = scalar_select %p440, %s439, 0
        %s442 = smul.u32 4, %s441
        %p443 = scmp.lt.s32.totalorder %s27, 1
        %s444 = scalar_select %p443, %s27, 1
        %p445 = scmp.lt.s32.totalorder %s442, 3
        %s446 = scalar_select %p445, %s442, 3
        %s447 = smul.addr %s444, 16
        %s448 = sadd.s32 %s446, %s447
        %s449 = smul.addr %s448, 8
        %s450 = scalar_lea.vmem %s7, %s449
        %s451 = ssub.s32 %s28, 1
        %p452 = scmp.gt.s32.totalorder %s451, 0
        %s453 = scalar_select %p452, %s451, 0
        %s454 = smul.u32 4, %s453
        %s455 = ssub.s32 %s28, 1
        %p456 = scmp.gt.s32.totalorder %s455, 0
        %s457 = scalar_select %p456, %s455, 0
        %s458 = smul.u32 4, %s457
        %p460 = scmp.eq.s32.totalorder %s28, 0
        // Predicated region
        $region53: #{attention_gate.1} parent=51 // pred_check
          %p461 = pneg %p460
        $region54: #{attention_gate.1} parent=51 // pred_check_branch
          %463 = sbr.rel (%p461) target = $region56
        $region55: #{attention_gate.1} parent=51 // pred_region
          %vm464 = vcmask 130048
          %465 = vst.msk [vmem:[#allocation2] sm:$0xff] %vm464, 0.0
          %466 = vst.msk [vmem:[#allocation2 + $0x8] sm:$0xff] %vm464, 0.0
        $region56: #{attention_gate.1} parent=51 // pred_fallthru
          _
        %p467 = scmp.lt.s32.totalorder %s28, 1
        // Predicated region
        $region57: #{attention_gate.1} parent=51 // pred_check
          %p468 = pneg %p467
        $region58: #{attention_gate.1} parent=51 // pred_check_branch
          %470 = sbr.rel (%p468) target = $region60
        $region59: #{attention_gate.1} parent=51 // pred_region
          %v471 = vld [vmem:[%s423] sm:$0xf]
          %v472 = vld [vmem:[%s423 + $0x4] sm:$0xf]
          %v473 = vld [vmem:[%s423 + $0x8] sm:$0xf]
          %v474 = vld [vmem:[%s423 + $0xc] sm:$0xf]
          %v475 = vld [vmem:[%s423 + $0x10] sm:$0xf]
          %v476 = vld [vmem:[%s423 + $0x14] sm:$0xf]
          %v477 = vld [vmem:[%s423 + $0x18] sm:$0xf]
          %v478 = vld [vmem:[%s423 + $0x1c] sm:$0xf]
          %v479 = vld [vmem:[%s423 + $0x20] sm:$0xf]
          %v480 = vld [vmem:[%s423 + $0x24] sm:$0xf]
          %v481 = vld [vmem:[%s423 + $0x28] sm:$0xf]
          %v482 = vld [vmem:[%s423 + $0x2c] sm:$0xf]
          %v483 = vld [vmem:[%s423 + $0x30] sm:$0xf]
          %v484 = vld [vmem:[%s423 + $0x34] sm:$0xf]
          %v485 = vld [vmem:[%s423 + $0x38] sm:$0xf]
          %v486 = vld [vmem:[%s423 + $0x3c] sm:$0xf]
          %v487 = vld [vmem:[%s423 + $0x40] sm:$0xf]
          %v488 = vld [vmem:[%s423 + $0x44] sm:$0xf]
          %v489 = vld [vmem:[%s423 + $0x48] sm:$0xf]
          %v490 = vld [vmem:[%s423 + $0x4c] sm:$0xf]
          %v491 = vld [vmem:[%s423 + $0x50] sm:$0xf]
          %v492 = vld [vmem:[%s423 + $0x54] sm:$0xf]
          %v493 = vld [vmem:[%s423 + $0x58] sm:$0xf]
          %v494 = vld [vmem:[%s423 + $0x5c] sm:$0xf]
          %v495 = vld [vmem:[%s423 + $0x60] sm:$0xf]
          %v496 = vld [vmem:[%s423 + $0x64] sm:$0xf]
          %v497 = vld [vmem:[%s423 + $0x68] sm:$0xf]
          %v498 = vld [vmem:[%s423 + $0x6c] sm:$0xf]
          %v499 = vld [vmem:[%s423 + $0x70] sm:$0xf]
          %v500 = vld [vmem:[%s423 + $0x74] sm:$0xf]
          %v501 = vld [vmem:[%s423 + $0x78] sm:$0xf]
          %v502 = vld [vmem:[%s423 + $0x7c] sm:$0xf]
          %v503 = vld [vmem:[%s1] sm:$0xf]
          %v504 = vld [vmem:[%s1 + $0x4] sm:$0xf]
          %v505 = vld [vmem:[%s1 + $0x8] sm:$0xf]
          %v506 = vld [vmem:[%s1 + $0xc] sm:$0xf]
          %v507 = vld [vmem:[%s1 + $0x10] sm:$0xf]
          %v508 = vld [vmem:[%s2] sm:$0x1]
          %v510 = vlaneseq
          %v511 = vshrl.u32 %v510, 7
          %v512 = vsub.s32 0, %v511
          %v513 = vrot.slane %v508, %v512
          %v547 = vunpack.c.l.b16 %v471
          %v548 = vunpack.c.l.b16 %v472
          %v549 = vunpack.c.l.b16 %v473
          %v550 = vunpack.c.l.b16 %v474
          %v551 = vunpack.c.l.b16 %v475
          %v552 = vunpack.c.l.b16 %v476
          %v553 = vunpack.c.l.b16 %v477
          %v554 = vunpack.c.l.b16 %v478
          %v555 = vunpack.c.l.b16 %v479
          %v556 = vunpack.c.l.b16 %v480
          %v557 = vunpack.c.l.b16 %v481
          %v558 = vunpack.c.l.b16 %v482
          %v559 = vunpack.c.l.b16 %v483
          %v560 = vunpack.c.l.b16 %v484
          %v561 = vunpack.c.l.b16 %v485
          %v562 = vunpack.c.l.b16 %v486
          %v563 = vunpack.c.l.b16 %v487
          %v564 = vunpack.c.l.b16 %v488
          %v565 = vunpack.c.l.b16 %v489
          %v566 = vunpack.c.l.b16 %v490
          %v567 = vunpack.c.l.b16 %v491
          %v568 = vunpack.c.l.b16 %v492
          %v569 = vunpack.c.l.b16 %v493
          %v570 = vunpack.c.l.b16 %v494
          %v571 = vunpack.c.l.b16 %v495
          %v572 = vunpack.c.l.b16 %v496
          %v573 = vunpack.c.l.b16 %v497
          %v574 = vunpack.c.l.b16 %v498
          %v575 = vunpack.c.l.b16 %v499
          %v576 = vunpack.c.l.b16 %v500
          %v577 = vunpack.c.l.b16 %v501
          %v578 = vunpack.c.l.b16 %v502
          %v579 = vpack.c.b16 %v548, %v547
          %v580 = vpack.c.b16 %v550, %v549
          %v581 = vpack.c.b16 %v552, %v551
          %v582 = vpack.c.b16 %v554, %v553
          %v583 = vpack.c.b16 %v556, %v555
          %v584 = vpack.c.b16 %v558, %v557
          %v585 = vpack.c.b16 %v560, %v559
          %v586 = vpack.c.b16 %v562, %v561
          %v587 = vpack.c.b16 %v564, %v563
          %v588 = vpack.c.b16 %v566, %v565
          %v589 = vpack.c.b16 %v568, %v567
          %v590 = vpack.c.b16 %v570, %v569
          %v591 = vpack.c.b16 %v572, %v571
          %v592 = vpack.c.b16 %v574, %v573
          %v593 = vpack.c.b16 %v576, %v575
          %v594 = vpack.c.b16 %v578, %v577
          %v600 = vunpack.c.l.b16 %v503
          %v601 = vunpack.c.l.b16 %v504
          %v602 = vunpack.c.l.b16 %v505
          %v603 = vunpack.c.l.b16 %v506
          %v604 = vunpack.c.l.b16 %v507
          %v605 = vpack.c.b16 %v601, %v600
          %v606 = vpack.c.b16 %v603, %v602
          %v607 = vpack.c.b16 %v604, %v604
          %vm610 = vcmask 326656
          %v612 = vsel %vm610, %v579, 0
          %v615 = vsel %vm610, %v580, 0
          %v618 = vsel %vm610, %v581, 0
          %v621 = vsel %vm610, %v582, 0
          %v624 = vsel %vm610, %v583, 0
          %v627 = vsel %vm610, %v584, 0
          %v630 = vsel %vm610, %v585, 0
          %v633 = vsel %vm610, %v586, 0
          %v636 = vsel %vm610, %v587, 0
          %v639 = vsel %vm610, %v588, 0
          %v642 = vsel %vm610, %v589, 0
          %v645 = vsel %vm610, %v590, 0
          %v648 = vsel %vm610, %v591, 0
          %v651 = vsel %vm610, %v592, 0
          %v654 = vsel %vm610, %v593, 0
          %v657 = vsel %vm610, %v594, 0
          %vm659 = vcmask 1043456
          %v661 = vsel %vm659, %v607, 0
          %663 = vmatprep.subr.bf16.mxu0 0
          %664 = vmatpush1.bf16.msra.mxu0 %v605
          %665 = vmatprep.subr.bf16.mxu0 0
          %666 = vmatpush1.bf16.msra.mxu0 %v606
          %667 = vmatprep.subr.bf16.mxu0 0
          %668 = vmatpush1.bf16.msra.mxu0 %v661
          %669 = vmatprep.subr.bf16.mxu0 0
          %670 = vmatpush1.bf16.msra.mxu0 0
          %671 = vmatprep.subr.bf16.mxu0 0
          %672 = vmatpush1.bf16.msra.mxu0 0
          %673 = vmatprep.subr.bf16.mxu0 0
          %674 = vmatpush1.bf16.msra.mxu0 0
          %675 = vmatprep.subr.bf16.mxu0 0
          %676 = vmatpush1.bf16.msra.mxu0 0
          %677 = vmatprep.subr.bf16.mxu0 0
          %678 = vmatpush1.bf16.msra.mxu0 0
          %679 = vmatprep.subr.bf16.mxu0 0
          %680 = vmatpush1.bf16.msra.mxu0 0
          %681 = vmatprep.subr.bf16.mxu0 0
          %682 = vmatpush1.bf16.msra.mxu0 0
          %683 = vmatprep.subr.bf16.mxu0 0
          %684 = vmatpush1.bf16.msra.mxu0 0
          %685 = vmatprep.subr.bf16.mxu0 0
          %686 = vmatpush1.bf16.msra.mxu0 0
          %687 = vmatprep.subr.bf16.mxu0 0
          %688 = vmatpush1.bf16.msra.mxu0 0
          %689 = vmatprep.subr.bf16.mxu0 0
          %690 = vmatpush1.bf16.msra.mxu0 0
          %691 = vmatprep.subr.bf16.mxu0 0
          %692 = vmatpush1.bf16.msra.mxu0 0
          %693 = vmatprep.subr.bf16.mxu0 0
          %694 = vmatpush1.bf16.msra.mxu0 0
          %695 = vmatprep.mubr.bf16.mxu0 0
          %696 = vmatmul.mubr.bf16.gmra.mrb[0].mxu0 %v612
          %v697 = vpop.f32.mrb[0].mxu0
          %v698 = vadd.f32 %v513, %v697
          %v699 = vpop.f32.mrb[0].mxu0
          %v700 = vpop.f32.mrb[0].mxu0
          %v701 = vadd.f32 %v513, %v700
          %v702 = vpop.f32.mrb[0].mxu0
          %703 = vmatprep.mubr.bf16.mxu0 0
          %704 = vmatmul.mubr.bf16.gmra.mrb[0].mxu0 %v615
          %v705 = vpop.f32.mrb[0].mxu0
          %v706 = vadd.f32 %v513, %v705
          %v707 = vpop.f32.mrb[0].mxu0
          %v708 = vpop.f32.mrb[0].mxu0
          %v709 = vadd.f32 %v513, %v708
          %v710 = vpop.f32.mrb[0].mxu0
          %711 = vmatprep.mubr.bf16.mxu0 0
          %712 = vmatmul.mubr.bf16.gmra.mrb[0].mxu0 %v618
          %v713 = vpop.f32.mrb[0].mxu0
          %v714 = vadd.f32 %v513, %v713
          %v715 = vpop.f32.mrb[0].mxu0
          %v716 = vpop.f32.mrb[0].mxu0
          %v717 = vadd.f32 %v513, %v716
          %v718 = vpop.f32.mrb[0].mxu0
          %719 = vmatprep.mubr.bf16.mxu0 0
          %720 = vmatmul.mubr.bf16.gmra.mrb[0].mxu0 %v621
          %v721 = vpop.f32.mrb[0].mxu0
          %v722 = vadd.f32 %v513, %v721
          %v723 = vpop.f32.mrb[0].mxu0
          %v724 = vpop.f32.mrb[0].mxu0
          %v725 = vadd.f32 %v513, %v724
          %v726 = vpop.f32.mrb[0].mxu0
          %727 = vmatprep.mubr.bf16.mxu0 0
          %728 = vmatmul.mubr.bf16.gmra.mrb[0].mxu0 %v624
          %v729 = vpop.f32.mrb[0].mxu0
          %v730 = vadd.f32 %v513, %v729
          %v731 = vpop.f32.mrb[0].mxu0
          %v732 = vpop.f32.mrb[0].mxu0
          %v733 = vadd.f32 %v513, %v732
          %v734 = vpop.f32.mrb[0].mxu0
          %735 = vmatprep.mubr.bf16.mxu0 0
          %736 = vmatmul.mubr.bf16.gmra.mrb[0].mxu0 %v627
          %v737 = vpop.f32.mrb[0].mxu0
          %v738 = vadd.f32 %v513, %v737
          %v739 = vpop.f32.mrb[0].mxu0
          %v740 = vpop.f32.mrb[0].mxu0
          %v741 = vadd.f32 %v513, %v740
          %v742 = vpop.f32.mrb[0].mxu0
          %743 = vmatprep.mubr.bf16.mxu0 0
          %744 = vmatmul.mubr.bf16.gmra.mrb[0].mxu0 %v630
          %v745 = vpop.f32.mrb[0].mxu0
          %v746 = vadd.f32 %v513, %v745
          %v747 = vpop.f32.mrb[0].mxu0
          %v748 = vpop.f32.mrb[0].mxu0
          %v749 = vadd.f32 %v513, %v748
          %v750 = vpop.f32.mrb[0].mxu0
          %751 = vmatprep.mubr.bf16.mxu0 0
          %752 = vmatmul.mubr.bf16.gmra.mrb[0].mxu0 %v633
          %v753 = vpop.f32.mrb[0].mxu0
          %v754 = vadd.f32 %v513, %v753
          %v755 = vpop.f32.mrb[0].mxu0
          %v756 = vpop.f32.mrb[0].mxu0
          %v757 = vadd.f32 %v513, %v756
          %v758 = vpop.f32.mrb[0].mxu0
          %759 = vmatprep.mubr.bf16.mxu0 0
          %760 = vmatmul.mubr.bf16.gmra.mrb[0].mxu0 %v636
          %v761 = vpop.f32.mrb[0].mxu0
          %v762 = vadd.f32 %v513, %v761
          %v763 = vpop.f32.mrb[0].mxu0
          %v764 = vpop.f32.mrb[0].mxu0
          %v765 = vadd.f32 %v513, %v764
          %v766 = vpop.f32.mrb[0].mxu0
          %767 = vmatprep.mubr.bf16.mxu0 0
          %768 = vmatmul.mubr.bf16.gmra.mrb[0].mxu0 %v639
          %v769 = vpop.f32.mrb[0].mxu0
          %v770 = vadd.f32 %v513, %v769
          %v771 = vpop.f32.mrb[0].mxu0
          %v772 = vpop.f32.mrb[0].mxu0
          %v773 = vadd.f32 %v513, %v772
          %v774 = vpop.f32.mrb[0].mxu0
          %775 = vmatprep.mubr.bf16.mxu0 0
          %776 = vmatmul.mubr.bf16.gmra.mrb[0].mxu0 %v642
          %v777 = vpop.f32.mrb[0].mxu0
          %v778 = vadd.f32 %v513, %v777
          %v779 = vpop.f32.mrb[0].mxu0
          %v780 = vpop.f32.mrb[0].mxu0
          %v781 = vadd.f32 %v513, %v780
          %v782 = vpop.f32.mrb[0].mxu0
          %783 = vmatprep.mubr.bf16.mxu0 0
          %784 = vmatmul.mubr.bf16.gmra.mrb[0].mxu0 %v645
          %v785 = vpop.f32.mrb[0].mxu0
          %v786 = vadd.f32 %v513, %v785
          %v787 = vpop.f32.mrb[0].mxu0
          %v788 = vpop.f32.mrb[0].mxu0
          %v789 = vadd.f32 %v513, %v788
          %v790 = vpop.f32.mrb[0].mxu0
          %791 = vmatprep.mubr.bf16.mxu0 0
          %792 = vmatmul.mubr.bf16.gmra.mrb[0].mxu0 %v648
          %v793 = vpop.f32.mrb[0].mxu0
          %v794 = vadd.f32 %v513, %v793
          %v795 = vpop.f32.mrb[0].mxu0
          %v796 = vpop.f32.mrb[0].mxu0
          %v797 = vadd.f32 %v513, %v796
          %v798 = vpop.f32.mrb[0].mxu0
          %799 = vmatprep.mubr.bf16.mxu0 0
          %800 = vmatmul.mubr.bf16.gmra.mrb[0].mxu0 %v651
          %v801 = vpop.f32.mrb[0].mxu0
          %v802 = vadd.f32 %v513, %v801
          %v803 = vpop.f32.mrb[0].mxu0
          %v804 = vpop.f32.mrb[0].mxu0
          %v805 = vadd.f32 %v513, %v804
          %v806 = vpop.f32.mrb[0].mxu0
          %807 = vmatprep.mubr.bf16.mxu0 0
          %808 = vmatmul.mubr.bf16.gmra.mrb[0].mxu0 %v654
          %v809 = vpop.f32.mrb[0].mxu0
          %v810 = vadd.f32 %v513, %v809
          %v811 = vpop.f32.mrb[0].mxu0
          %v812 = vpop.f32.mrb[0].mxu0
          %v813 = vadd.f32 %v513, %v812
          %v814 = vpop.f32.mrb[0].mxu0
          %815 = vmatprep.mubr.bf16.mxu0 0
          %816 = vmatmul.mubr.bf16.gmra.mrb[0].mxu0 %v657
          %v817 = vpop.f32.mrb[0].mxu0
          %v818 = vadd.f32 %v513, %v817
          %v819 = vpop.f32.mrb[0].mxu0
          %v820 = vpop.f32.mrb[0].mxu0
          %v821 = vadd.f32 %v513, %v820
          %v822 = vpop.f32.mrb[0].mxu0
          %823 = vdwg.mxu0
          %v824 = vmax.f32 %v698, 0.0
          %v825 = vmax.f32 %v701, 0.0
          %v826 = vmax.f32 %v706, 0.0
          %v827 = vmax.f32 %v709, 0.0
          %v828 = vmax.f32 %v714, 0.0
          %v829 = vmax.f32 %v717, 0.0
          %v830 = vmax.f32 %v722, 0.0
          %v831 = vmax.f32 %v725, 0.0
          %v832 = vmax.f32 %v730, 0.0
          %v833 = vmax.f32 %v733, 0.0
          %v834 = vmax.f32 %v738, 0.0
          %v835 = vmax.f32 %v741, 0.0
          %v836 = vmax.f32 %v746, 0.0
          %v837 = vmax.f32 %v749, 0.0
          %v838 = vmax.f32 %v754, 0.0
          %v839 = vmax.f32 %v757, 0.0
          %v840 = vmax.f32 %v762, 0.0
          %v841 = vmax.f32 %v765, 0.0
          %v842 = vmax.f32 %v770, 0.0
          %v843 = vmax.f32 %v773, 0.0
          %v844 = vmax.f32 %v778, 0.0
          %v845 = vmax.f32 %v781, 0.0
          %v846 = vmax.f32 %v786, 0.0
          %v847 = vmax.f32 %v789, 0.0
          %v848 = vmax.f32 %v794, 0.0
          %v849 = vmax.f32 %v797, 0.0
          %v850 = vmax.f32 %v802, 0.0
          %v851 = vmax.f32 %v805, 0.0
          %v852 = vmax.f32 %v810, 0.0
          %v853 = vmax.f32 %v813, 0.0
          %v854 = vmax.f32 %v818, 0.0
          %v855 = vmax.f32 %v821, 0.0
          %v856 = vld [vmem:[%s3] sm:$0x1]
          %v858 = vlaneseq
          %v859 = vshrl.u32 %v858, 7
          %v860 = vsub.s32 0, %v859
          %v861 = vrot.slane %v856, %v860
          %v863 = vmul.f32 %v824, %v861
          %v864 = vmul.f32 %v825, %v861
          %v865 = vmul.f32 %v826, %v861
          %v866 = vmul.f32 %v827, %v861
          %v867 = vmul.f32 %v828, %v861
          %v868 = vmul.f32 %v829, %v861
          %v869 = vmul.f32 %v830, %v861
          %v870 = vmul.f32 %v831, %v861
          %v871 = vmul.f32 %v832, %v861
          %v872 = vmul.f32 %v833, %v861
          %v873 = vmul.f32 %v834, %v861
          %v874 = vmul.f32 %v835, %v861
          %v875 = vmul.f32 %v836, %v861
          %v876 = vmul.f32 %v837, %v861
          %v877 = vmul.f32 %v838, %v861
          %v878 = vmul.f32 %v839, %v861
          %v879 = vmul.f32 %v840, %v861
          %v880 = vmul.f32 %v841, %v861
          %v881 = vmul.f32 %v842, %v861
          %v882 = vmul.f32 %v843, %v861
          %v883 = vmul.f32 %v844, %v861
          %v884 = vmul.f32 %v845, %v861
          %v885 = vmul.f32 %v846, %v861
          %v886 = vmul.f32 %v847, %v861
          %v887 = vmul.f32 %v848, %v861
          %v888 = vmul.f32 %v849, %v861
          %v889 = vmul.f32 %v850, %v861
          %v890 = vmul.f32 %v851, %v861
          %v891 = vmul.f32 %v852, %v861
          %v892 = vmul.f32 %v853, %v861
          %v893 = vmul.f32 %v854, %v861
          %v894 = vmul.f32 %v855, %v861
          %895 = vadd.xlane.f32.xlu0 %v863
          %v896 = vpop.xlane.xlu0 %895
          %897 = vadd.xlane.f32.xlu0 %v864
          %v898 = vpop.xlane.xlu0 %897
          %899 = vadd.xlane.f32.xlu0 %v865
          %v900 = vpop.xlane.xlu0 %899
          %901 = vadd.xlane.f32.xlu0 %v866
          %v902 = vpop.xlane.xlu0 %901
          %903 = vadd.xlane.f32.xlu0 %v867
          %v904 = vpop.xlane.xlu0 %903
          %905 = vadd.xlane.f32.xlu0 %v868
          %v906 = vpop.xlane.xlu0 %905
          %907 = vadd.xlane.f32.xlu0 %v869
          %v908 = vpop.xlane.xlu0 %907
          %909 = vadd.xlane.f32.xlu0 %v870
          %v910 = vpop.xlane.xlu0 %909
          %911 = vadd.xlane.f32.xlu0 %v871
          %v912 = vpop.xlane.xlu0 %911
          %913 = vadd.xlane.f32.xlu0 %v872
          %v914 = vpop.xlane.xlu0 %913
          %915 = vadd.xlane.f32.xlu0 %v873
          %v916 = vpop.xlane.xlu0 %915
          %917 = vadd.xlane.f32.xlu0 %v874
          %v918 = vpop.xlane.xlu0 %917
          %919 = vadd.xlane.f32.xlu0 %v875
          %v920 = vpop.xlane.xlu0 %919
          %921 = vadd.xlane.f32.xlu0 %v876
          %v922 = vpop.xlane.xlu0 %921
          %923 = vadd.xlane.f32.xlu0 %v877
          %v924 = vpop.xlane.xlu0 %923
          %925 = vadd.xlane.f32.xlu0 %v878
          %v926 = vpop.xlane.xlu0 %925
          %927 = vadd.xlane.f32.xlu0 %v879
          %v928 = vpop.xlane.xlu0 %927
          %929 = vadd.xlane.f32.xlu0 %v880
          %v930 = vpop.xlane.xlu0 %929
          %931 = vadd.xlane.f32.xlu0 %v881
          %v932 = vpop.xlane.xlu0 %931
          %933 = vadd.xlane.f32.xlu0 %v882
          %v934 = vpop.xlane.xlu0 %933
          %935 = vadd.xlane.f32.xlu0 %v883
          %v936 = vpop.xlane.xlu0 %935
          %937 = vadd.xlane.f32.xlu0 %v884
          %v938 = vpop.xlane.xlu0 %937
          %939 = vadd.xlane.f32.xlu0 %v885
          %v940 = vpop.xlane.xlu0 %939
          %941 = vadd.xlane.f32.xlu0 %v886
          %v942 = vpop.xlane.xlu0 %941
          %943 = vadd.xlane.f32.xlu0 %v887
          %v944 = vpop.xlane.xlu0 %943
          %945 = vadd.xlane.f32.xlu0 %v888
          %v946 = vpop.xlane.xlu0 %945
          %947 = vadd.xlane.f32.xlu0 %v889
          %v948 = vpop.xlane.xlu0 %947
          %949 = vadd.xlane.f32.xlu0 %v890
          %v950 = vpop.xlane.xlu0 %949
          %951 = vadd.xlane.f32.xlu0 %v891
          %v952 = vpop.xlane.xlu0 %951
          %953 = vadd.xlane.f32.xlu0 %v892
          %v954 = vpop.xlane.xlu0 %953
          %955 = vadd.xlane.f32.xlu0 %v893
          %v956 = vpop.xlane.xlu0 %955
          %957 = vadd.xlane.f32.xlu0 %v894
          %v958 = vpop.xlane.xlu0 %957
          %s959 = sld [smem:[#allocation3]]
          %v960 = vstv %s959
          %v961 = vadd.f32 %v896, %v960
          %v962 = vadd.f32 %v898, %v960
          %v963 = vadd.f32 %v900, %v960
          %v964 = vadd.f32 %v902, %v960
          %v965 = vadd.f32 %v904, %v960
          %v966 = vadd.f32 %v906, %v960
          %v967 = vadd.f32 %v908, %v960
          %v968 = vadd.f32 %v910, %v960
          %v969 = vadd.f32 %v912, %v960
          %v970 = vadd.f32 %v914, %v960
          %v971 = vadd.f32 %v916, %v960
          %v972 = vadd.f32 %v918, %v960
          %v973 = vadd.f32 %v920, %v960
          %v974 = vadd.f32 %v922, %v960
          %v975 = vadd.f32 %v924, %v960
          %v976 = vadd.f32 %v926, %v960
          %v977 = vadd.f32 %v928, %v960
          %v978 = vadd.f32 %v930, %v960
          %v979 = vadd.f32 %v932, %v960
          %v980 = vadd.f32 %v934, %v960
          %v981 = vadd.f32 %v936, %v960
          %v982 = vadd.f32 %v938, %v960
          %v983 = vadd.f32 %v940, %v960
          %v984 = vadd.f32 %v942, %v960
          %v985 = vadd.f32 %v944, %v960
          %v986 = vadd.f32 %v946, %v960
          %v987 = vadd.f32 %v948, %v960
          %v988 = vadd.f32 %v950, %v960
          %v989 = vadd.f32 %v952, %v960
          %v990 = vadd.f32 %v954, %v960
          %v991 = vadd.f32 %v956, %v960
          %v992 = vadd.f32 %v958, %v960
          %s993 = smul.u32 %s28, 16
          %v994 = vxor.u32 %v961, 2147483648
          %v995 = vxor.u32 %v962, 2147483648
          %v996 = vxor.u32 %v963, 2147483648
          %v997 = vxor.u32 %v964, 2147483648
          %v998 = vxor.u32 %v965, 2147483648
          %v999 = vxor.u32 %v966, 2147483648
          %v1000 = vxor.u32 %v967, 2147483648
          %v1001 = vxor.u32 %v968, 2147483648
          %v1002 = vxor.u32 %v969, 2147483648
          %v1003 = vxor.u32 %v970, 2147483648
          %v1004 = vxor.u32 %v971, 2147483648
          %v1005 = vxor.u32 %v972, 2147483648
          %v1006 = vxor.u32 %v973, 2147483648
          %v1007 = vxor.u32 %v974, 2147483648
          %v1008 = vxor.u32 %v975, 2147483648
          %v1009 = vxor.u32 %v976, 2147483648
          %v1010 = vxor.u32 %v977, 2147483648
          %v1011 = vxor.u32 %v978, 2147483648
          %v1012 = vxor.u32 %v979, 2147483648
          %v1013 = vxor.u32 %v980, 2147483648
          %v1014 = vxor.u32 %v981, 2147483648
          %v1015 = vxor.u32 %v982, 2147483648
          %v1016 = vxor.u32 %v983, 2147483648
          %v1017 = vxor.u32 %v984, 2147483648
          %v1018 = vxor.u32 %v985, 2147483648
          %v1019 = vxor.u32 %v986, 2147483648
          %v1020 = vxor.u32 %v987, 2147483648
          %v1021 = vxor.u32 %v988, 2147483648
          %v1022 = vxor.u32 %v989, 2147483648
          %v1023 = vxor.u32 %v990, 2147483648
          %v1024 = vxor.u32 %v991, 2147483648
          %v1025 = vxor.u32 %v992, 2147483648
          %v1026 = vmul.f32 %v994, 1.442695
          %v1027 = vpow.pop %v1026
          %v1028 = vmul.f32 %v995, 1.442695
          %v1029 = vpow.pop %v1028
          %v1030 = vmul.f32 %v996, 1.442695
          %v1031 = vpow.pop %v1030
          %v1032 = vmul.f32 %v997, 1.442695
          %v1033 = vpow.pop %v1032
          %v1034 = vmul.f32 %v998, 1.442695
          %v1035 = vpow.pop %v1034
          %v1036 = vmul.f32 %v999, 1.442695
          %v1037 = vpow.pop %v1036
          %v1038 = vmul.f32 %v1000, 1.442695
          %v1039 = vpow.pop %v1038
          %v1040 = vmul.f32 %v1001, 1.442695
          %v1041 = vpow.pop %v1040
          %v1042 = vmul.f32 %v1002, 1.442695
          %v1043 = vpow.pop %v1042
          %v1044 = vmul.f32 %v1003, 1.442695
          %v1045 = vpow.pop %v1044
          %v1046 = vmul.f32 %v1004, 1.442695
          %v1047 = vpow.pop %v1046
          %v1048 = vmul.f32 %v1005, 1.442695
          %v1049 = vpow.pop %v1048
          %v1050 = vmul.f32 %v1006, 1.442695
          %v1051 = vpow.pop %v1050
          %v1052 = vmul.f32 %v1007, 1.442695
          %v1053 = vpow.pop %v1052
          %v1054 = vmul.f32 %v1008, 1.442695
          %v1055 = vpow.pop %v1054
          %v1056 = vmul.f32 %v1009, 1.442695
          %v1057 = vpow.pop %v1056
          %v1058 = vmul.f32 %v1010, 1.442695
          %v1059 = vpow.pop %v1058
          %v1060 = vmul.f32 %v1011, 1.442695
          %v1061 = vpow.pop %v1060
          %v1062 = vmul.f32 %v1012, 1.442695
          %v1063 = vpow.pop %v1062
          %v1064 = vmul.f32 %v1013, 1.442695
          %v1065 = vpow.pop %v1064
          %v1066 = vmul.f32 %v1014, 1.442695
          %v1067 = vpow.pop %v1066
          %v1068 = vmul.f32 %v1015, 1.442695
          %v1069 = vpow.pop %v1068
          %v1070 = vmul.f32 %v1016, 1.442695
          %v1071 = vpow.pop %v1070
          %v1072 = vmul.f32 %v1017, 1.442695
          %v1073 = vpow.pop %v1072
          %v1074 = vmul.f32 %v1018, 1.442695
          %v1075 = vpow.pop %v1074
          %v1076 = vmul.f32 %v1019, 1.442695
          %v1077 = vpow.pop %v1076
          %v1078 = vmul.f32 %v1020, 1.442695
          %v1079 = vpow.pop %v1078
          %v1080 = vmul.f32 %v1021, 1.442695
          %v1081 = vpow.pop %v1080
          %v1082 = vmul.f32 %v1022, 1.442695
          %v1083 = vpow.pop %v1082
          %v1084 = vmul.f32 %v1023, 1.442695
          %v1085 = vpow.pop %v1084
          %v1086 = vmul.f32 %v1024, 1.442695
          %v1087 = vpow.pop %v1086
          %v1088 = vmul.f32 %v1025, 1.442695
          %v1089 = vpow.pop %v1088
          %v1090 = vadd.f32 %v1027, 1.0
          %v1091 = vadd.f32 %v1029, 1.0
          %v1092 = vadd.f32 %v1031, 1.0
          %v1093 = vadd.f32 %v1033, 1.0
          %v1094 = vadd.f32 %v1035, 1.0
          %v1095 = vadd.f32 %v1037, 1.0
          %v1096 = vadd.f32 %v1039, 1.0
          %v1097 = vadd.f32 %v1041, 1.0
          %v1098 = vadd.f32 %v1043, 1.0
          %v1099 = vadd.f32 %v1045, 1.0
          %v1100 = vadd.f32 %v1047, 1.0
          %v1101 = vadd.f32 %v1049, 1.0
          %v1102 = vadd.f32 %v1051, 1.0
          %v1103 = vadd.f32 %v1053, 1.0
          %v1104 = vadd.f32 %v1055, 1.0
          %v1105 = vadd.f32 %v1057, 1.0
          %v1106 = vadd.f32 %v1059, 1.0
          %v1107 = vadd.f32 %v1061, 1.0
          %v1108 = vadd.f32 %v1063, 1.0
          %v1109 = vadd.f32 %v1065, 1.0
          %v1110 = vadd.f32 %v1067, 1.0
          %v1111 = vadd.f32 %v1069, 1.0
          %v1112 = vadd.f32 %v1071, 1.0
          %v1113 = vadd.f32 %v1073, 1.0
          %v1114 = vadd.f32 %v1075, 1.0
          %v1115 = vadd.f32 %v1077, 1.0
          %v1116 = vadd.f32 %v1079, 1.0
          %v1117 = vadd.f32 %v1081, 1.0
          %v1118 = vadd.f32 %v1083, 1.0
          %v1119 = vadd.f32 %v1085, 1.0
          %v1120 = vadd.f32 %v1087, 1.0
          %v1121 = vadd.f32 %v1089, 1.0
          %v1122 = vrcp.pop %v1090
          %v1123 = vmul.f32 1.0, %v1122
          %v1124 = vrcp.pop %v1091
          %v1125 = vmul.f32 1.0, %v1124
          %v1126 = vrcp.pop %v1092
          %v1127 = vmul.f32 1.0, %v1126
          %v1128 = vrcp.pop %v1093
          %v1129 = vmul.f32 1.0, %v1128
          %v1130 = vrcp.pop %v1094
          %v1131 = vmul.f32 1.0, %v1130
          %v1132 = vrcp.pop %v1095
          %v1133 = vmul.f32 1.0, %v1132
          %v1134 = vrcp.pop %v1096
          %v1135 = vmul.f32 1.0, %v1134
          %v1136 = vrcp.pop %v1097
          %v1137 = vmul.f32 1.0, %v1136
          %v1138 = vrcp.pop %v1098
          %v1139 = vmul.f32 1.0, %v1138
          %v1140 = vrcp.pop %v1099
          %v1141 = vmul.f32 1.0, %v1140
          %v1142 = vrcp.pop %v1100
          %v1143 = vmul.f32 1.0, %v1142
          %v1144 = vrcp.pop %v1101
          %v1145 = vmul.f32 1.0, %v1144
          %v1146 = vrcp.pop %v1102
          %v1147 = vmul.f32 1.0, %v1146
          %v1148 = vrcp.pop %v1103
          %v1149 = vmul.f32 1.0, %v1148
          %v1150 = vrcp.pop %v1104
          %v1151 = vmul.f32 1.0, %v1150
          %v1152 = vrcp.pop %v1105
          %v1153 = vmul.f32 1.0, %v1152
          %v1154 = vrcp.pop %v1106
          %v1155 = vmul.f32 1.0, %v1154
          %v1156 = vrcp.pop %v1107
          %v1157 = vmul.f32 1.0, %v1156
          %v1158 = vrcp.pop %v1108
          %v1159 = vmul.f32 1.0, %v1158
          %v1160 = vrcp.pop %v1109
          %v1161 = vmul.f32 1.0, %v1160
          %v1162 = vrcp.pop %v1110
          %v1163 = vmul.f32 1.0, %v1162
          %v1164 = vrcp.pop %v1111
          %v1165 = vmul.f32 1.0, %v1164
          %v1166 = vrcp.pop %v1112
          %v1167 = vmul.f32 1.0, %v1166
          %v1168 = vrcp.pop %v1113
          %v1169 = vmul.f32 1.0, %v1168
          %v1170 = vrcp.pop %v1114
          %v1171 = vmul.f32 1.0, %v1170
          %v1172 = vrcp.pop %v1115
          %v1173 = vmul.f32 1.0, %v1172
          %v1174 = vrcp.pop %v1116
          %v1175 = vmul.f32 1.0, %v1174
          %v1176 = vrcp.pop %v1117
          %v1177 = vmul.f32 1.0, %v1176
          %v1178 = vrcp.pop %v1118
          %v1179 = vmul.f32 1.0, %v1178
          %v1180 = vrcp.pop %v1119
          %v1181 = vmul.f32 1.0, %v1180
          %v1182 = vrcp.pop %v1120
          %v1183 = vmul.f32 1.0, %v1182
          %v1184 = vrcp.pop %v1121
          %v1185 = vmul.f32 1.0, %v1184
          %v1218 = vlaneseq
          %v1219 = vand.u32 %v1218, 127
          %v1220 = vlaneseq
          %v1221 = vshrl.u32 %v1220, 7
          %v1222 = vsub.s32 %v1219, %v1221
          %v1223 = vrot.slane %v1123, %v1222
          %v1224 = vadd.s32 %v1219, 4294967288
          %v1225 = vlaneseq
          %v1226 = vshrl.u32 %v1225, 7
          %v1227 = vsub.s32 %v1224, %v1226
          %v1228 = vrot.slane %v1125, %v1227
          %vm1229 = vcmask 130112
          %v1230 = vsel %vm1229, %v1228, %v1223
          %v1231 = vlaneseq
          %v1232 = vshrl.u32 %v1231, 7
          %v1233 = vsub.s32 %v1219, %v1232
          %v1234 = vrot.slane %v1127, %v1233
          %v1235 = vlaneseq
          %v1236 = vshrl.u32 %v1235, 7
          %v1237 = vsub.s32 %v1224, %v1236
          %v1238 = vrot.slane %v1129, %v1237
          %v1239 = vsel %vm1229, %v1238, %v1234
          %v1240 = vlaneseq
          %v1241 = vshrl.u32 %v1240, 7
          %v1242 = vsub.s32 %v1219, %v1241
          %v1243 = vrot.slane %v1131, %v1242
          %v1244 = vlaneseq
          %v1245 = vshrl.u32 %v1244, 7
          %v1246 = vsub.s32 %v1224, %v1245
          %v1247 = vrot.slane %v1133, %v1246
          %v1248 = vsel %vm1229, %v1247, %v1243
          %v1249 = vlaneseq
          %v1250 = vshrl.u32 %v1249, 7
          %v1251 = vsub.s32 %v1219, %v1250
          %v1252 = vrot.slane %v1135, %v1251
          %v1253 = vlaneseq
          %v1254 = vshrl.u32 %v1253, 7
          %v1255 = vsub.s32 %v1224, %v1254
          %v1256 = vrot.slane %v1137, %v1255
          %v1257 = vsel %vm1229, %v1256, %v1252
          %v1258 = vlaneseq
          %v1259 = vshrl.u32 %v1258, 7
          %v1260 = vsub.s32 %v1219, %v1259
          %v1261 = vrot.slane %v1139, %v1260
          %v1262 = vlaneseq
          %v1263 = vshrl.u32 %v1262, 7
          %v1264 = vsub.s32 %v1224, %v1263
          %v1265 = vrot.slane %v1141, %v1264
          %v1266 = vsel %vm1229, %v1265, %v1261
          %v1267 = vlaneseq
          %v1268 = vshrl.u32 %v1267, 7
          %v1269 = vsub.s32 %v1219, %v1268
          %v1270 = vrot.slane %v1143, %v1269
          %v1271 = vlaneseq
          %v1272 = vshrl.u32 %v1271, 7
          %v1273 = vsub.s32 %v1224, %v1272
          %v1274 = vrot.slane %v1145, %v1273
          %v1275 = vsel %vm1229, %v1274, %v1270
          %v1276 = vlaneseq
          %v1277 = vshrl.u32 %v1276, 7
          %v1278 = vsub.s32 %v1219, %v1277
          %v1279 = vrot.slane %v1147, %v1278
          %v1280 = vlaneseq
          %v1281 = vshrl.u32 %v1280, 7
          %v1282 = vsub.s32 %v1224, %v1281
          %v1283 = vrot.slane %v1149, %v1282
          %v1284 = vsel %vm1229, %v1283, %v1279
          %v1285 = vlaneseq
          %v1286 = vshrl.u32 %v1285, 7
          %v1287 = vsub.s32 %v1219, %v1286
          %v1288 = vrot.slane %v1151, %v1287
          %v1289 = vlaneseq
          %v1290 = vshrl.u32 %v1289, 7
          %v1291 = vsub.s32 %v1224, %v1290
          %v1292 = vrot.slane %v1153, %v1291
          %v1293 = vsel %vm1229, %v1292, %v1288
          %v1294 = vlaneseq
          %v1295 = vshrl.u32 %v1294, 7
          %v1296 = vsub.s32 %v1219, %v1295
          %v1297 = vrot.slane %v1155, %v1296
          %v1298 = vlaneseq
          %v1299 = vshrl.u32 %v1298, 7
          %v1300 = vsub.s32 %v1224, %v1299
          %v1301 = vrot.slane %v1157, %v1300
          %v1302 = vsel %vm1229, %v1301, %v1297
          %v1303 = vlaneseq
          %v1304 = vshrl.u32 %v1303, 7
          %v1305 = vsub.s32 %v1219, %v1304
          %v1306 = vrot.slane %v1159, %v1305
          %v1307 = vlaneseq
          %v1308 = vshrl.u32 %v1307, 7
          %v1309 = vsub.s32 %v1224, %v1308
          %v1310 = vrot.slane %v1161, %v1309
          %v1311 = vsel %vm1229, %v1310, %v1306
          %v1312 = vlaneseq
          %v1313 = vshrl.u32 %v1312, 7
          %v1314 = vsub.s32 %v1219, %v1313
          %v1315 = vrot.slane %v1163, %v1314
          %v1316 = vlaneseq
          %v1317 = vshrl.u32 %v1316, 7
          %v1318 = vsub.s32 %v1224, %v1317
          %v1319 = vrot.slane %v1165, %v1318
          %v1320 = vsel %vm1229, %v1319, %v1315
          %v1321 = vlaneseq
          %v1322 = vshrl.u32 %v1321, 7
          %v1323 = vsub.s32 %v1219, %v1322
          %v1324 = vrot.slane %v1167, %v1323
          %v1325 = vlaneseq
          %v1326 = vshrl.u32 %v1325, 7
          %v1327 = vsub.s32 %v1224, %v1326
          %v1328 = vrot.slane %v1169, %v1327
          %v1329 = vsel %vm1229, %v1328, %v1324
          %v1330 = vlaneseq
          %v1331 = vshrl.u32 %v1330, 7
          %v1332 = vsub.s32 %v1219, %v1331
          %v1333 = vrot.slane %v1171, %v1332
          %v1334 = vlaneseq
          %v1335 = vshrl.u32 %v1334, 7
          %v1336 = vsub.s32 %v1224, %v1335
          %v1337 = vrot.slane %v1173, %v1336
          %v1338 = vsel %vm1229, %v1337, %v1333
          %v1339 = vlaneseq
          %v1340 = vshrl.u32 %v1339, 7
          %v1341 = vsub.s32 %v1219, %v1340
          %v1342 = vrot.slane %v1175, %v1341
          %v1343 = vlaneseq
          %v1344 = vshrl.u32 %v1343, 7
          %v1345 = vsub.s32 %v1224, %v1344
          %v1346 = vrot.slane %v1177, %v1345
          %v1347 = vsel %vm1229, %v1346, %v1342
          %v1348 = vlaneseq
          %v1349 = vshrl.u32 %v1348, 7
          %v1350 = vsub.s32 %v1219, %v1349
          %v1351 = vrot.slane %v1179, %v1350
          %v1352 = vlaneseq
          %v1353 = vshrl.u32 %v1352, 7
          %v1354 = vsub.s32 %v1224, %v1353
          %v1355 = vrot.slane %v1181, %v1354
          %v1356 = vsel %vm1229, %v1355, %v1351
          %v1357 = vlaneseq
          %v1358 = vshrl.u32 %v1357, 7
          %v1359 = vsub.s32 %v1219, %v1358
          %v1360 = vrot.slane %v1183, %v1359
          %v1361 = vlaneseq
          %v1362 = vshrl.u32 %v1361, 7
          %v1363 = vsub.s32 %v1224, %v1362
          %v1364 = vrot.slane %v1185, %v1363
          %v1365 = vsel %vm1229, %v1364, %v1360
          %vm1366 = vcmask 1041409
          %v1367 = vsel %vm1366, %v1239, %v1230
          %vm1368 = vcmask 1042434
          %v1369 = vsel %vm1368, %v1248, %v1367
          %vm1370 = vcmask 1043459
          %v1371 = vsel %vm1370, %v1257, %v1369
          %vm1372 = vcmask 1044484
          %v1373 = vsel %vm1372, %v1266, %v1371
          %vm1374 = vcmask 1045509
          %v1375 = vsel %vm1374, %v1275, %v1373
          %vm1376 = vcmask 1046534
          %v1377 = vsel %vm1376, %v1284, %v1375
          %vm1378 = vcmask 1047559
          %v1379 = vsel %vm1378, %v1293, %v1377
          %v1380 = vsel %vm1366, %v1311, %v1302
          %v1381 = vsel %vm1368, %v1320, %v1380
          %v1382 = vsel %vm1370, %v1329, %v1381
          %v1383 = vsel %vm1372, %v1338, %v1382
          %v1384 = vsel %vm1374, %v1347, %v1383
          %v1385 = vsel %vm1376, %v1356, %v1384
          %v1386 = vsel %vm1378, %v1365, %v1385
          %s1389 = scalar_lea.vmem [#allocation2], %s993
          %vm1390 = vcmask 130048
          %1391 = vst.msk [vmem:[%s1389] sm:$0xff] %vm1390, %v1379
          %1392 = vst.msk [vmem:[%s1389 + $0x8] sm:$0xff] %vm1390, %v1386
        $region60: #{attention_gate.1} parent=51 // pred_fallthru
          _
        %p1393 = scmp.gt.s32.totalorder %s28, 0
        // Predicated region
        $region61: #{attention_gate.1} parent=51 // pred_check
          %p1394 = pneg %p1393
        $region62: #{attention_gate.1} parent=51 // pred_check_branch
          %1396 = sbr.rel (%p1394) target = $region64
        $region63: #{attention_gate.1} parent=51 // pred_region
          %v1397 = vld [vmem:[%s434] sm:$0xff]
          %v1398 = vld [vmem:[%s434 + $0x8] sm:$0xff]
          %v1399 = vld [vmem:[%s434 + $0x10] sm:$0xff]
          %v1400 = vld [vmem:[%s434 + $0x18] sm:$0xff]
          %v1401 = vld [vmem:[#allocation2] sm:$0xff]
          %v1402 = vld [vmem:[#allocation2 + $0x8] sm:$0xff]
          %vm1403 = vcmask 130048
          %v1405 = vsel %vm1403, %v1397, 0
          %v1408 = vsel %vm1403, %v1398, 0
          %v1411 = vsel %vm1403, %v1399, 0
          %v1414 = vsel %vm1403, %v1400, 0
          %1416 = vmatprep.subr.mxu0 0.0
          %1417 = vmatpush1.msra.mxu0 %v1401
          %1418 = vmatprep.subr.mxu0 0.0
          %1419 = vmatpush1.msra.mxu0 %v1402
          %1420 = vmatprep.subr.mxu0 0.0
          %1421 = vmatpush1.msra.mxu0 0.0
          %1422 = vmatprep.subr.mxu0 0.0
          %1423 = vmatpush1.msra.mxu0 0.0
          %1424 = vmatprep.subr.mxu0 0.0
          %1425 = vmatpush1.msra.mxu0 0.0
          %1426 = vmatprep.subr.mxu0 0.0
          %1427 = vmatpush1.msra.mxu0 0.0
          %1428 = vmatprep.subr.mxu0 0.0
          %1429 = vmatpush1.msra.mxu0 0.0
          %1430 = vmatprep.subr.mxu0 0.0
          %1431 = vmatpush1.msra.mxu0 0.0
          %1432 = vmatprep.subr.mxu0 0.0
          %1433 = vmatpush1.msra.mxu0 0.0
          %1434 = vmatprep.subr.mxu0 0.0
          %1435 = vmatpush1.msra.mxu0 0.0
          %1436 = vmatprep.subr.mxu0 0.0
          %1437 = vmatpush1.msra.mxu0 0.0
          %1438 = vmatprep.subr.mxu0 0.0
          %1439 = vmatpush1.msra.mxu0 0.0
          %1440 = vmatprep.subr.mxu0 0.0
          %1441 = vmatpush1.msra.mxu0 0.0
          %1442 = vmatprep.subr.mxu0 0.0
          %1443 = vmatpush1.msra.mxu0 0.0
          %1444 = vmatprep.subr.mxu0 0.0
          %1445 = vmatpush1.msra.mxu0 0.0
          %1446 = vmatprep.subr.mxu0 0.0
          %1447 = vmatpush1.msra.mxu0 0.0
          %1448 = vmatprep.subr.mxu0 0.0
          %1449 = vmatpush1.msra.mxu0 0.0
          %1450 = vmatprep.subr.mxu0 0.0
          %1451 = vmatpush1.msra.mxu0 0.0
          %1452 = vmatprep.subr.mxu0 0.0
          %1453 = vmatpush1.msra.mxu0 0.0
          %1454 = vmatprep.subr.mxu0 0.0
          %1455 = vmatpush1.msra.mxu0 0.0
          %1456 = vmatprep.subr.mxu0 0.0
          %1457 = vmatpush1.msra.mxu0 0.0
          %1458 = vmatprep.subr.mxu0 0.0
          %1459 = vmatpush1.msra.mxu0 0.0
          %1460 = vmatprep.subr.mxu0 0.0
          %1461 = vmatpush1.msra.mxu0 0.0
          %1462 = vmatprep.subr.mxu0 0.0
          %1463 = vmatpush1.msra.mxu0 0.0
          %1464 = vmatprep.subr.mxu0 0.0
          %1465 = vmatpush1.msra.mxu0 0.0
          %1466 = vmatprep.subr.mxu0 0.0
          %1467 = vmatpush1.msra.mxu0 0.0
          %1468 = vmatprep.subr.mxu0 0.0
          %1469 = vmatpush1.msra.mxu0 0.0
          %1470 = vmatprep.subr.mxu0 0.0
          %1471 = vmatpush1.msra.mxu0 0.0
          %1472 = vmatprep.subr.mxu0 0.0
          %1473 = vmatpush1.msra.mxu0 0.0
          %1474 = vmatprep.subr.mxu0 0.0
          %1475 = vmatpush1.msra.mxu0 0.0
          %1476 = vmatprep.subr.mxu0 0.0
          %1477 = vmatpush1.msra.mxu0 0.0
          %1478 = vmatprep.subr.mxu0 0.0
          %1479 = vmatpush1.msra.mxu0 0.0
          %1480 = vmatprep.mubr.f32.mxu0 0.0
          %1481 = vmatmul.mubr.f32.gmra.mrb[0].mxu0 %v1405
          %v1482 = vpop.f32.mrb[0].mxu0
          %v1483 = vadd.f32 0.0, %v1482
          %v1484 = vpop.f32.mrb[0].mxu0
          %1485 = vmatprep.mubr.f32.mxu0 0.0
          %1486 = vmatmul.mubr.f32.gmra.mrb[0].mxu0 %v1408
          %v1487 = vpop.f32.mrb[0].mxu0
          %v1488 = vadd.f32 0.0, %v1487
          %v1489 = vpop.f32.mrb[0].mxu0
          %1490 = vmatprep.mubr.f32.mxu0 0.0
          %1491 = vmatmul.mubr.f32.gmra.mrb[0].mxu0 %v1411
          %v1492 = vpop.f32.mrb[0].mxu0
          %v1493 = vadd.f32 0.0, %v1492
          %v1494 = vpop.f32.mrb[0].mxu0
          %1495 = vmatprep.mubr.f32.mxu0 0.0
          %1496 = vmatmul.mubr.f32.gmra.mrb[0].mxu0 %v1414
          %v1497 = vpop.f32.mrb[0].mxu0
          %v1498 = vadd.f32 0.0, %v1497
          %v1499 = vpop.f32.mrb[0].mxu0
          %1500 = vdwg.mxu0
          %v1501 = vld [vmem:[%s6] sm:$0xff]
          %v1502 = vld [vmem:[%s6 + $0x8] sm:$0xff]
          %v1504 = vsel %vm1403, %v1483, 0
          %v1507 = vsel %vm1403, %v1488, 0
          %v1510 = vsel %vm1403, %v1493, 0
          %v1513 = vsel %vm1403, %v1498, 0
          %1515 = vmatprep.subr.mxu0 0.0
          %1516 = vmatpush1.msra.mxu0 %v1501
          %1517 = vmatprep.subr.mxu0 0.0
          %1518 = vmatpush1.msra.mxu0 %v1502
          %1519 = vmatprep.subr.mxu0 0.0
          %1520 = vmatpush1.msra.mxu0 0.0
          %1521 = vmatprep.subr.mxu0 0.0
          %1522 = vmatpush1.msra.mxu0 0.0
          %1523 = vmatprep.subr.mxu0 0.0
          %1524 = vmatpush1.msra.mxu0 0.0
          %1525 = vmatprep.subr.mxu0 0.0
          %1526 = vmatpush1.msra.mxu0 0.0
          %1527 = vmatprep.subr.mxu0 0.0
          %1528 = vmatpush1.msra.mxu0 0.0
          %1529 = vmatprep.subr.mxu0 0.0
          %1530 = vmatpush1.msra.mxu0 0.0
          %1531 = vmatprep.subr.mxu0 0.0
          %1532 = vmatpush1.msra.mxu0 0.0
          %1533 = vmatprep.subr.mxu0 0.0
          %1534 = vmatpush1.msra.mxu0 0.0
          %1535 = vmatprep.subr.mxu0 0.0
          %1536 = vmatpush1.msra.mxu0 0.0
          %1537 = vmatprep.subr.mxu0 0.0
          %1538 = vmatpush1.msra.mxu0 0.0
          %1539 = vmatprep.subr.mxu0 0.0
          %1540 = vmatpush1.msra.mxu0 0.0
          %1541 = vmatprep.subr.mxu0 0.0
          %1542 = vmatpush1.msra.mxu0 0.0
          %1543 = vmatprep.subr.mxu0 0.0
          %1544 = vmatpush1.msra.mxu0 0.0
          %1545 = vmatprep.subr.mxu0 0.0
          %1546 = vmatpush1.msra.mxu0 0.0
          %1547 = vmatprep.subr.mxu0 0.0
          %1548 = vmatpush1.msra.mxu0 0.0
          %1549 = vmatprep.subr.mxu0 0.0
          %1550 = vmatpush1.msra.mxu0 0.0
          %1551 = vmatprep.subr.mxu0 0.0
          %1552 = vmatpush1.msra.mxu0 0.0
          %1553 = vmatprep.subr.mxu0 0.0
          %1554 = vmatpush1.msra.mxu0 0.0
          %1555 = vmatprep.subr.mxu0 0.0
          %1556 = vmatpush1.msra.mxu0 0.0
          %1557 = vmatprep.subr.mxu0 0.0
          %1558 = vmatpush1.msra.mxu0 0.0
          %1559 = vmatprep.subr.mxu0 0.0
          %1560 = vmatpush1.msra.mxu0 0.0
          %1561 = vmatprep.subr.mxu0 0.0
          %1562 = vmatpush1.msra.mxu0 0.0
          %1563 = vmatprep.subr.mxu0 0.0
          %1564 = vmatpush1.msra.mxu0 0.0
          %1565 = vmatprep.subr.mxu0 0.0
          %1566 = vmatpush1.msra.mxu0 0.0
          %1567 = vmatprep.subr.mxu0 0.0
          %1568 = vmatpush1.msra.mxu0 0.0
          %1569 = vmatprep.subr.mxu0 0.0
          %1570 = vmatpush1.msra.mxu0 0.0
          %1571 = vmatprep.subr.mxu0 0.0
          %1572 = vmatpush1.msra.mxu0 0.0
          %1573 = vmatprep.subr.mxu0 0.0
          %1574 = vmatpush1.msra.mxu0 0.0
          %1575 = vmatprep.subr.mxu0 0.0
          %1576 = vmatpush1.msra.mxu0 0.0
          %1577 = vmatprep.subr.mxu0 0.0
          %1578 = vmatpush1.msra.mxu0 0.0
          %1579 = vmatprep.mubr.f32.mxu0 0.0
          %1580 = vmatmul.mubr.f32.gmra.mrb[0].mxu0 %v1504
          %v1581 = vpop.f32.mrb[0].mxu0
          %v1582 = vadd.f32 0.0, %v1581
          %v1583 = vpop.f32.mrb[0].mxu0
          %1584 = vmatprep.mubr.f32.mxu0 0.0
          %1585 = vmatmul.mubr.f32.gmra.mrb[0].mxu0 %v1507
          %v1586 = vpop.f32.mrb[0].mxu0
          %v1587 = vadd.f32 0.0, %v1586
          %v1588 = vpop.f32.mrb[0].mxu0
          %1589 = vmatprep.mubr.f32.mxu0 0.0
          %1590 = vmatmul.mubr.f32.gmra.mrb[0].mxu0 %v1510
          %v1591 = vpop.f32.mrb[0].mxu0
          %v1592 = vadd.f32 0.0, %v1591
          %v1593 = vpop.f32.mrb[0].mxu0
          %1594 = vmatprep.mubr.f32.mxu0 0.0
          %1595 = vmatmul.mubr.f32.gmra.mrb[0].mxu0 %v1513
          %v1596 = vpop.f32.mrb[0].mxu0
          %v1597 = vadd.f32 0.0, %v1596
          %v1598 = vpop.f32.mrb[0].mxu0
          %1599 = vdwg.mxu0
          %v1600 = vld [vmem:[%s450] sm:$0xff]
          %v1601 = vld [vmem:[%s450 + $0x8] sm:$0xff]
          %v1602 = vld [vmem:[%s450 + $0x10] sm:$0xff]
          %v1603 = vld [vmem:[%s450 + $0x18] sm:$0xff]
          %v1604 = vld [vmem:[%s450 + $0x20] sm:$0xff]
          %v1605 = vld [vmem:[%s450 + $0x28] sm:$0xff]
          %v1606 = vld [vmem:[%s450 + $0x30] sm:$0xff]
          %v1607 = vld [vmem:[%s450 + $0x38] sm:$0xff]
          %v1608 = vld [vmem:[%s450 + $0x40] sm:$0xff]
          %v1609 = vld [vmem:[%s450 + $0x48] sm:$0xff]
          %v1610 = vld [vmem:[%s450 + $0x50] sm:$0xff]
          %v1611 = vld [vmem:[%s450 + $0x58] sm:$0xff]
          %v1612 = vld [vmem:[%s450 + $0x60] sm:$0xff]
          %v1613 = vld [vmem:[%s450 + $0x68] sm:$0xff]
          %v1614 = vld [vmem:[%s450 + $0x70] sm:$0xff]
          %v1615 = vld [vmem:[%s450 + $0x78] sm:$0xff]
          %v1616 = vmul.f32 %v1582, %v1600
          %v1617 = vmul.f32 %v1587, %v1601
          %v1618 = vmul.f32 %v1592, %v1602
          %v1619 = vmul.f32 %v1597, %v1603
          %v1620 = vmul.f32 %v1582, %v1604
          %v1621 = vmul.f32 %v1587, %v1605
          %v1622 = vmul.f32 %v1592, %v1606
          %v1623 = vmul.f32 %v1597, %v1607
          %v1624 = vmul.f32 %v1582, %v1608
          %v1625 = vmul.f32 %v1587, %v1609
          %v1626 = vmul.f32 %v1592, %v1610
          %v1627 = vmul.f32 %v1597, %v1611
          %v1628 = vmul.f32 %v1582, %v1612
          %v1629 = vmul.f32 %v1587, %v1613
          %v1630 = vmul.f32 %v1592, %v1614
          %v1631 = vmul.f32 %v1597, %v1615
          %vm1632 = vcmask 261120
          %1633 = vst.msk [vmem:[%s412] sm:$0xff] %vm1632, %v1616
          %1634 = vst.msk [vmem:[%s412 + $0x8] sm:$0xff] %vm1632, %v1617
          %1635 = vst.msk [vmem:[%s412 + $0x10] sm:$0xff] %vm1632, %v1618
          %1636 = vst.msk [vmem:[%s412 + $0x18] sm:$0xff] %vm1632, %v1619
          %1637 = vst.msk [vmem:[%s412 + $0x20] sm:$0xff] %vm1632, %v1620
          %1638 = vst.msk [vmem:[%s412 + $0x28] sm:$0xff] %vm1632, %v1621
          %1639 = vst.msk [vmem:[%s412 + $0x30] sm:$0xff] %vm1632, %v1622
          %1640 = vst.msk [vmem:[%s412 + $0x38] sm:$0xff] %vm1632, %v1623
          %1641 = vst.msk [vmem:[%s412 + $0x40] sm:$0xff] %vm1632, %v1624
          %1642 = vst.msk [vmem:[%s412 + $0x48] sm:$0xff] %vm1632, %v1625
          %1643 = vst.msk [vmem:[%s412 + $0x50] sm:$0xff] %vm1632, %v1626
          %1644 = vst.msk [vmem:[%s412 + $0x58] sm:$0xff] %vm1632, %v1627
          %1645 = vst.msk [vmem:[%s412 + $0x60] sm:$0xff] %vm1632, %v1628
          %1646 = vst.msk [vmem:[%s412 + $0x68] sm:$0xff] %vm1632, %v1629
          %1647 = vst.msk [vmem:[%s412 + $0x70] sm:$0xff] %vm1632, %v1630
          %1648 = vst.msk [vmem:[%s412 + $0x78] sm:$0xff] %vm1632, %v1631
        $region64: #{attention_gate.1} parent=51 // pred_fallthru
          _
        %s1649 = sand.u32 %s254, 1
        %s1650 = scalar_lea.sflag [#allocation5], %s1649
        %s1651 = sand.u32 %s254, 1
        %s1652 = smul.addr %s1651, 128
        %s1653 = scalar_lea.vmem [#allocation4], %s1652
        // Predicated region
        $region65: #{attention_gate.1} parent=51 // pred_check
          %p1654 = pneg %p264
        $region66: #{attention_gate.1} parent=51 // pred_check_branch
          %1656 = sbr.rel (%p1654) target = $region68
        $region67: #{attention_gate.1} parent=51 // pred_region
          %s1657 = ssub.s32 %s28, 1
          %p1658 = scmp.gt.s32.totalorder %s1657, 0
          %s1659 = scalar_select %p1658, %s1657, 0
          %s1660 = smul.u32 4, %s1659
          %s1662 = ssub.s32 2048, 2048
          %1663 = vsyncadd %s1650, %s1662
          %s1664 = smul.addr %s27, 16
          %s1665 = sadd.s32 %s1660, %s1664
          %s1666 = smul.addr %s1665, 128
          %s1667 = scalar_lea.hbm %s8, %s1666
          %s1668 = sshll.u32 %s1653, 4
          %s1669 = int_to_ptr.vmem [resolvable:$true] %s1668
          %1674 = dma.vmem_to_hbm [thread:$0]  %s1669, 2048, %s1667, %s1650, 128, 128, 8
        $region68: #{attention_gate.1} parent=51 // pred_fallthru
          _
      $region52: #{attention_gate.1} parent=5 // pred_fallthru
        _
      %p1675 = scmp.le.s32.totalorder 2, %s18
      // Predicated region
      $region69: #{attention_gate.1} parent=5 // pred_check
        %p1676 = pneg %p1675
      $region70: #{attention_gate.1} parent=5 // pred_check_branch
        %1678 = sbr.rel (%p1676) target = $region72
      $region71: #{attention_gate.1} parent=5 // pred_region
        %s1679 = ssub.s32 %s18, 2
        // Predicated region
        $region73: #{attention_gate.1} parent=71 // pred_check
          %p1680 = pneg %p270
        $region74: #{attention_gate.1} parent=71 // pred_check_branch
          %1682 = sbr.rel (%p1680) target = $region76
        $region75: #{attention_gate.1} parent=71 // pred_region
          %s1683 = sand.u32 %s255, 1
          %s1684 = scalar_lea.sflag [#allocation5], %s1683
          %s1685 = sand.u32 %s255, 1
          %s1686 = smul.addr %s1685, 128
          %s1687 = scalar_lea.vmem [#allocation4], %s1686
          %1688 = dma.done %s1684, 2048
        $region76: #{attention_gate.1} parent=71 // pred_fallthru
          _
      $region72: #{attention_gate.1} parent=5 // pred_fallthru
        _
    $region6: #{attention_gate.1} parent=1 // loop_footer
      %s22 = sadd.s32 1, %s18
    $region7: #{attention_gate.1} parent=1 // loop_footer_branch
      %17 = sbr.rel target = $region3
    $region8: #{attention_gate.1} parent=1 // loop_exit
      _
    %1689 = vsyncpa [#allocation5], 1
    %s1690 = scalar_lea.sflag [#allocation5], 1
    %1691 = vsyncpa %s1690, 1

</llo_original>
